<compile_context>
chip_gen: v7x
topology: tpu7x:2x2x1
jax: 0.10.0
libtpu: 0.0.40
codegen_flags: <defaults>
</compile_context>

<pallas_src>
import math

import jax
import jax.numpy as jnp
from jax.experimental import pallas as pl
from jax.experimental.pallas import tpu as pltpu

# ----- model config (small, consistent with the module's __init__) -----
BATCH = 2
SEQ = 8
HIDDEN = 32
NUM_HEADS = 4
HEAD_DIM = HIDDEN // NUM_HEADS
NUM_KV_HEADS = NUM_HEADS          # SDPA used without enable_gqa -> kv heads == heads
INTERMEDIATE = 64
NUM_LAYERS = 2
LN_EPS = 1e-5


def _layernorm(x, w, b):
    """torch.nn.LayerNorm (eps=1e-5, affine). One-pass: both reductions issued
    together, var = E[x^2] - mean^2 (overlaps the two XLU cross-lane reduces)."""
    n = x.shape[-1]
    s1 = jnp.sum(x, axis=-1, keepdims=True)
    s2 = jnp.sum(x * x, axis=-1, keepdims=True)
    mu = s1 * (1.0 / n)
    var = s2 * (1.0 / n) - mu * mu
    return (x - mu) * jax.lax.rsqrt(var + LN_EPS) * w + b


def stacked_decoder_kernel(
    bias_ref,                     # (T, T)  f32   additive block-diag causal mask
    x_ref,                        # (T, H)  f32   flattened input tokens (layer 0 only)
    ln1_w_ref, ln1_b_ref,         # (1, 1, H) f32
    wqkv_ref,                     # (1, H, 3H) bf16   fused [Wq*scale | Wk | Wv]
    wo_ref,                       # (1, H, H)  bf16
    bo_ref,                       # (1, 1, H)  f32
    ln2_w_ref, ln2_b_ref,         # (1, 1, H)  f32
    w1_ref, b1_ref,               # (1, H, I) bf16, (1, 1, I) f32
    w2_ref, b2_ref,               # (1, I, H) bf16, (1, 1, H) f32
    fln_w_ref, fln_b_ref,         # (1, H) f32   final BaseModel.norm
    out_ref,                      # (T, H) f32   resident carry of hidden_states
):
    layer = pl.program_id(0)
    last = pl.num_programs(0) - 1

    # Layer 0: seed the resident activation carry from the input tokens.
    @pl.when(layer == 0)
    def _():
        out_ref[...] = x_ref[...]

    x = out_ref[...]                                   # (T, H) f32 hidden state
    T, H = x.shape
    D = HEAD_DIM

    # ---- input_layernorm ----
    h = _layernorm(x, ln1_w_ref[0], ln1_b_ref[0])

    # ---- fused QKV: ONE (T,H)@(H,3H) bf16 MXU push (Wq pre-scaled by 1/sqrt(D)) ----
    qkv = jnp.dot(h.astype(jnp.bfloat16), wqkv_ref[0],
                  preferred_element_type=jnp.float32)  # (T, 3H) f32

    # ---- causal SDPA (per-head 2-D tiles; softmax / mask in f32) ----
    bias = bias_ref[...]
    o_heads = []
    for n in range(NUM_HEADS):
        lo = n * D
        q_n = qkv[:, lo:lo + D]                        # (T, D), already scaled
        k_n = qkv[:, H + lo:H + lo + D]
        v_n = qkv[:, 2 * H + lo:2 * H + lo + D]
        s_n = jnp.einsum("qd,kd->qk",
                         q_n.astype(jnp.bfloat16), k_n.astype(jnp.bfloat16),
                         preferred_element_type=jnp.float32)       # (T, T) f32
        s_n = s_n + bias
        s_n = s_n - jnp.max(s_n, axis=-1, keepdims=True)
        p_n = jnp.exp(s_n)
        p_n = p_n * pl.reciprocal(jnp.sum(p_n, axis=-1, keepdims=True),
                                  approx=True)                     # EUP slot
        o_heads.append(jnp.dot(p_n.astype(jnp.bfloat16), v_n.astype(jnp.bfloat16),
                               preferred_element_type=jnp.float32))  # (T, D)

    # ---- o_proj: heads back to lanes, then ONE (T,H)@(H,H) push + bias ----
    o_flat = jnp.concatenate(o_heads, axis=1)          # (T, H)
    attn = jnp.dot(o_flat.astype(jnp.bfloat16), wo_ref[0],
                   preferred_element_type=jnp.float32) + bo_ref[0]
    x = x + attn

    # ---- post_attention_layernorm + MLP (Linear -> GELU -> Linear, dropout 0.0) ----
    h = _layernorm(x, ln2_w_ref[0], ln2_b_ref[0])
    h = jnp.dot(h.astype(jnp.bfloat16), w1_ref[0],
                preferred_element_type=jnp.float32) + b1_ref[0]
    h = jax.nn.gelu(h, approximate=True)               # tanh form -> EUP slot
    h = jnp.dot(h.astype(jnp.bfloat16), w2_ref[0],
                preferred_element_type=jnp.float32) + b2_ref[0]
    x = x + h

    out_ref[...] = x                                   # carry to next layer

    # Last layer: fuse BaseModel's final LayerNorm (self.norm) into the same call.
    @pl.when(layer == last)
    def _():
        out_ref[...] = _layernorm(x, fln_w_ref[...], fln_b_ref[...])


def prepare_kernel_params(layer_params, final_ln, *, batch, seq, num_heads, head_dim):
    """One-time parameter prep (outside the hot path): fuse + scale QKV into a 2-D
    (H,3H) weight, stack all per-layer tensors along a leading layer axis, cast
    matmul weights to bf16, and build the flattened block-diag causal bias."""
    scale = 1.0 / math.sqrt(head_dim)

    def stack(key, dtype=jnp.float32):
        return jnp.stack([p[key] for p in layer_params]).astype(dtype)

    wqkv = jnp.stack([
        jnp.concatenate([p["wq"] * scale, p["wk"], p["wv"]], axis=1)
        for p in layer_params]).astype(jnp.bfloat16)              # (L, H, 3H)

    # Block-diagonal causal additive mask over the flattened (batch*seq) tokens:
    # token i attends to token j iff same batch and j <= i.
    t = batch * seq
    ri = jnp.arange(t)[:, None]
    ci = jnp.arange(t)[None, :]
    allowed = (ci <= ri) & ((ri // seq) == (ci // seq))
    attn_bias = jnp.where(allowed, 0.0, -1e30).astype(jnp.float32)

    fln_w, fln_b = final_ln
    return {
        "attn_bias": attn_bias,
        "ln1_w": stack("ln1_w"), "ln1_b": stack("ln1_b"),
        "wqkv": wqkv,
        "wo": stack("wo", jnp.bfloat16), "bo": stack("bo"),
        "ln2_w": stack("ln2_w"), "ln2_b": stack("ln2_b"),
        "w1": stack("w1", jnp.bfloat16), "b1": stack("b1"),
        "w2": stack("w2", jnp.bfloat16), "b2": stack("b2"),
        "fln_w": fln_w, "fln_b": fln_b,
    }


def base_model_layers(x, kp):
    """Runs all decoder layers + final LayerNorm in a single gridded pallas_call."""
    B, S, H = x.shape
    T = B * S
    L = kp["wqkv"].shape[0]
    xf = x.reshape(T, H)          # free XLA-side reshape; lane layout unchanged

    def const_spec(shape):        # fetched once (constant block index across layers)
        return pl.BlockSpec(shape, lambda l: (0, 0))

    def layer_spec(shape):        # (L, *shape): layer l's slice, auto double-buffered
        return pl.BlockSpec((1,) + shape, lambda l: (l, 0, 0))

    out = pl.pallas_call(
        stacked_decoder_kernel,
        out_shape=jax.ShapeDtypeStruct((T, H), jnp.float32),
        grid=(L,),
        in_specs=[
            const_spec((T, T)),                               # attn_bias
            const_spec((T, H)),                               # x
            layer_spec((1, H)), layer_spec((1, H)),           # ln1 w, b
            layer_spec((H, 3 * H)),                           # wqkv (bf16)
            layer_spec((H, H)), layer_spec((1, H)),           # wo (bf16), bo
            layer_spec((1, H)), layer_spec((1, H)),           # ln2 w, b
            layer_spec((H, INTERMEDIATE)),                    # w1 (bf16)
            layer_spec((1, INTERMEDIATE)),                    # b1
            layer_spec((INTERMEDIATE, H)),                    # w2 (bf16)
            layer_spec((1, H)),                               # b2
            const_spec((1, H)), const_spec((1, H)),           # final norm w, b
        ],
        # Same output block every grid step -> resident accumulator carrying the
        # hidden state across layers; written back to HBM once at the end.
        out_specs=const_spec((T, H)),
        compiler_params=pltpu.CompilerParams(
            dimension_semantics=("arbitrary",)),              # layers are sequential
    )(
        kp["attn_bias"], xf,
        kp["ln1_w"], kp["ln1_b"],
        kp["wqkv"], kp["wo"], kp["bo"],
        kp["ln2_w"], kp["ln2_b"],
        kp["w1"], kp["b1"], kp["w2"], kp["b2"],
        kp["fln_w"], kp["fln_b"],
    )
    return out.reshape(B, S, H)


# ---------------- pure-JAX f32 reference (un-transformed params) ----------------
def decoder_layer_ref(x, p):
    def ln(v, w, b):
        mu = jnp.mean(v, -1, keepdims=True)
        var = jnp.mean((v - mu) ** 2, -1, keepdims=True)
        return (v - mu) / jnp.sqrt(var + LN_EPS) * w[0] + b[0]

    res = x
    h = ln(x, p["ln1_w"], p["ln1_b"])
    q = h @ p["wq"]
    k = h @ p["wk"]
    v = h @ p["wv"]
    B, S, H = x.shape
    def split(a):
        return a.reshape(B, S, NUM_HEADS, HEAD_DIM).transpose(0, 2, 1, 3)
    q, k, v = split(q), split(k), split(v)
    scores = jnp.einsum("bhqd,bhkd->bhqk", q, k) / math.sqrt(HEAD_DIM)
    mask = jnp.tril(jnp.ones((S, S), bool))
    scores = jnp.where(mask, scores, -jnp.inf)
    pattn = jax.nn.softmax(scores, axis=-1)
    attn = jnp.einsum("bhqk,bhkd->bhqd", pattn, v).transpose(0, 2, 1, 3).reshape(B, S, H)
    attn = attn @ p["wo"] + p["bo"][0]
    x = res + attn
    res = x
    h = ln(x, p["ln2_w"], p["ln2_b"])
    h = jax.nn.gelu(h @ p["w1"] + p["b1"][0], approximate=True)
    h = h @ p["w2"] + p["b2"][0]
    return res + h


def base_model_layers_ref(x, layer_params, fln_w, fln_b):
    for p in layer_params:
        x = decoder_layer_ref(x, p)
    mu = jnp.mean(x, -1, keepdims=True)
    var = jnp.mean((x - mu) ** 2, -1, keepdims=True)
    return (x - mu) / jnp.sqrt(var + LN_EPS) * fln_w[0] + fln_b[0]


def make_layer_params(key):
    ks = jax.random.split(key, 13)
    s = 0.05
    return {
        # LayerNorm params slightly perturbed from the (1, 0) init so the affine
        # path is actually exercised by the test.
        "ln1_w": 1.0 + 0.1 * jax.random.normal(ks[9], (1, HIDDEN), jnp.float32),
        "ln1_b": 0.05 * jax.random.normal(ks[10], (1, HIDDEN), jnp.float32),
        "wq": s * jax.random.normal(ks[0], (HIDDEN, HIDDEN), jnp.float32),
        "wk": s * jax.random.normal(ks[1], (HIDDEN, HIDDEN), jnp.float32),
        "wv": s * jax.random.normal(ks[2], (HIDDEN, HIDDEN), jnp.float32),
        "wo": s * jax.random.normal(ks[3], (HIDDEN, HIDDEN), jnp.float32),
        "bo": s * jax.random.normal(ks[4], (1, HIDDEN), jnp.float32),
        "ln2_w": 1.0 + 0.1 * jax.random.normal(ks[11], (1, HIDDEN), jnp.float32),
        "ln2_b": 0.05 * jax.random.normal(ks[12], (1, HIDDEN), jnp.float32),
        "w1": s * jax.random.normal(ks[5], (HIDDEN, INTERMEDIATE), jnp.float32),
        "b1": s * jax.random.normal(ks[6], (1, INTERMEDIATE), jnp.float32),
        "w2": s * jax.random.normal(ks[7], (INTERMEDIATE, HIDDEN), jnp.float32),
        "b2": s * jax.random.normal(ks[8], (1, HIDDEN), jnp.float32),
    }


if __name__ == "__main__":
    key = jax.random.PRNGKey(0)
    keys = jax.random.split(key, NUM_LAYERS + 2)
    kx, kfln, layer_keys = keys[0], keys[1], keys[2:]

    x = jax.random.normal(kx, (BATCH, SEQ, HIDDEN), jnp.float32)
    layer_params = [make_layer_params(k) for k in layer_keys]
    kf = jax.random.split(kfln, 2)
    fln_w = 1.0 + 0.1 * jax.random.normal(kf[0], (1, HIDDEN), jnp.float32)
    fln_b = 0.05 * jax.random.normal(kf[1], (1, HIDDEN), jnp.float32)

    kernel_params = prepare_kernel_params(
        layer_params, (fln_w, fln_b),
        batch=BATCH, seq=SEQ, num_heads=NUM_HEADS, head_dim=HEAD_DIM)

    out = jax.block_until_ready(base_model_layers(x, kernel_params))
    ref = base_model_layers_ref(x, layer_params, fln_w, fln_b)

    assert out.shape == (BATCH, SEQ, HIDDEN)
    # Tolerance 5e-3: bf16 MXU operands (rel. rounding ~2^-8 per operand, f32
    # accumulation) plus the EUP approximate reciprocal in the softmax denominator
    # give a few-1e-3 max deviation vs the pure-f32 reference over 2 stacked layers.
    err = jnp.max(jnp.abs(out - ref))
    assert jnp.allclose(out, ref, atol=5e-3, rtol=5e-3), f"max abs err = {err}"
    print("KERNEL_OK")
</pallas_src>

<mosaic_0001>
module attributes {stable_mosaic.version = 11 : i64} {
  func.func @stacked_decoder_kernel(%arg0: i32, %arg1: memref<16x16xf32, #tpu.memory_space<vmem>>, %arg2: memref<16x32xf32, #tpu.memory_space<vmem>>, %arg3: memref<1x1x32xf32, #tpu.memory_space<vmem>>, %arg4: memref<1x1x32xf32, #tpu.memory_space<vmem>>, %arg5: memref<1x32x96xbf16, #tpu.memory_space<vmem>>, %arg6: memref<1x32x32xbf16, #tpu.memory_space<vmem>>, %arg7: memref<1x1x32xf32, #tpu.memory_space<vmem>>, %arg8: memref<1x1x32xf32, #tpu.memory_space<vmem>>, %arg9: memref<1x1x32xf32, #tpu.memory_space<vmem>>, %arg10: memref<1x32x64xbf16, #tpu.memory_space<vmem>>, %arg11: memref<1x1x64xf32, #tpu.memory_space<vmem>>, %arg12: memref<1x64x32xbf16, #tpu.memory_space<vmem>>, %arg13: memref<1x1x32xf32, #tpu.memory_space<vmem>>, %arg14: memref<1x32xf32, #tpu.memory_space<vmem>>, %arg15: memref<1x32xf32, #tpu.memory_space<vmem>>, %arg16: memref<16x32xf32, #tpu.memory_space<vmem>>) attributes {dimension_semantics = [#tpu.dimension_semantics<arbitrary>], iteration_bounds = array<i64: 2>, scalar_prefetch = 0 : i64, scratch_operands = 0 : i64, tpu.core_type = #tpu.core_type<tc>, window_params = [{pipeline_mode = #tpu.pipeline_mode<synchronous>, transform_indices = @transform_0, window_bounds = array<i64: 16, 16>}, {pipeline_mode = #tpu.pipeline_mode<synchronous>, transform_indices = @transform_1, window_bounds = array<i64: 16, 32>}, {transform_indices = @transform_2, window_bounds = array<i64: 1, 1, 32>}, {transform_indices = @transform_3, window_bounds = array<i64: 1, 1, 32>}, {transform_indices = @transform_4, window_bounds = array<i64: 1, 32, 96>}, {transform_indices = @transform_5, window_bounds = array<i64: 1, 32, 32>}, {transform_indices = @transform_6, window_bounds = array<i64: 1, 1, 32>}, {transform_indices = @transform_7, window_bounds = array<i64: 1, 1, 32>}, {transform_indices = @transform_8, window_bounds = array<i64: 1, 1, 32>}, {transform_indices = @transform_9, window_bounds = array<i64: 1, 32, 64>}, {transform_indices = @transform_10, window_bounds = array<i64: 1, 1, 64>}, {transform_indices = @transform_11, window_bounds = array<i64: 1, 64, 32>}, {transform_indices = @transform_12, window_bounds = array<i64: 1, 1, 32>}, {pipeline_mode = #tpu.pipeline_mode<synchronous>, transform_indices = @transform_13, window_bounds = array<i64: 1, 32>}, {pipeline_mode = #tpu.pipeline_mode<synchronous>, transform_indices = @transform_14, window_bounds = array<i64: 1, 32>}, {pipeline_mode = #tpu.pipeline_mode<synchronous>, transform_indices = @transform_15, window_bounds = array<i64: 16, 32>}]} {
    %c0_i32 = arith.constant 0 : i32
    %0 = arith.cmpi eq, %arg0, %c0_i32 : i32
    %1 = arith.extui %0 : i1 to i32
    %c0_i32_0 = arith.constant 0 : i32
    %2 = arith.cmpi ne, %1, %c0_i32_0 : i32
    scf.if %2 {
      %c0_73 = arith.constant 0 : index
      %c0_74 = arith.constant 0 : index
      %185 = vector.load %arg2[%c0_73, %c0_74] : memref<16x32xf32, #tpu.memory_space<vmem>>, vector<16x32xf32>
      %c0_75 = arith.constant 0 : index
      %c0_76 = arith.constant 0 : index
      %186 = vector.load %arg16[%c0_75, %c0_76] : memref<16x32xf32, #tpu.memory_space<vmem>>, vector<16x32xf32>
      tpu.vector_store %arg16[%c0_75, %c0_76], %185 {strides = array<i32>} : memref<16x32xf32, #tpu.memory_space<vmem>>, vector<16x32xf32>,
    } else {
    }
    %c0 = arith.constant 0 : index
    %c0_1 = arith.constant 0 : index
    %3 = vector.load %arg16[%c0, %c0_1] : memref<16x32xf32, #tpu.memory_space<vmem>>, vector<16x32xf32>
    %c0_2 = arith.constant 0 : index
    %c0_3 = arith.constant 0 : index
    %c0_4 = arith.constant 0 : index
    %4 = vector.load %arg3[%c0_2, %c0_3, %c0_4] : memref<1x1x32xf32, #tpu.memory_space<vmem>>, vector<1x1x32xf32>
    %5 = vector.shape_cast %4 : vector<1x1x32xf32> to vector<1x32xf32>
    %c0_5 = arith.constant 0 : index
    %c0_6 = arith.constant 0 : index
    %c0_7 = arith.constant 0 : index
    %6 = vector.load %arg4[%c0_5, %c0_6, %c0_7] : memref<1x1x32xf32, #tpu.memory_space<vmem>>, vector<1x1x32xf32>
    %7 = vector.shape_cast %6 : vector<1x1x32xf32> to vector<1x32xf32>
    %cst = arith.constant dense<0.000000e+00> : vector<16xf32>
    %8 = vector.multi_reduction <add>, %3, %cst [1] : vector<16x32xf32> to vector<16xf32>
    %9 = vector.shape_cast %8 : vector<16xf32> to vector<16x1xf32>
    %10 = arith.mulf %3, %3 : vector<16x32xf32>
    %cst_8 = arith.constant dense<0.000000e+00> : vector<16xf32>
    %11 = vector.multi_reduction <add>, %10, %cst_8 [1] : vector<16x32xf32> to vector<16xf32>
    %12 = vector.shape_cast %11 : vector<16xf32> to vector<16x1xf32>
    %cst_9 = arith.constant 3.125000e-02 : f32
    %13 = vector.broadcast %cst_9 : f32 to vector<16x1xf32>
    %14 = arith.mulf %9, %13 : vector<16x1xf32>
    %cst_10 = arith.constant 3.125000e-02 : f32
    %15 = vector.broadcast %cst_10 : f32 to vector<16x1xf32>
    %16 = arith.mulf %12, %15 : vector<16x1xf32>
    %17 = arith.mulf %14, %14 : vector<16x1xf32>
    %18 = arith.subf %16, %17 : vector<16x1xf32>
    %19 = vector.broadcast %14 : vector<16x1xf32> to vector<16x32xf32>
    %20 = arith.subf %3, %19 : vector<16x32xf32>
    %cst_11 = arith.constant 9.99999974E-6 : f32
    %21 = vector.broadcast %cst_11 : f32 to vector<16x1xf32>
    %22 = arith.addf %18, %21 : vector<16x1xf32>
    %23 = math.rsqrt %22 : vector<16x1xf32>
    %24 = vector.broadcast %23 : vector<16x1xf32> to vector<16x32xf32>
    %25 = arith.mulf %20, %24 : vector<16x32xf32>
    %26 = vector.broadcast %5 : vector<1x32xf32> to vector<16x32xf32>
    %27 = arith.mulf %25, %26 : vector<16x32xf32>
    %28 = vector.broadcast %7 : vector<1x32xf32> to vector<16x32xf32>
    %29 = arith.addf %27, %28 : vector<16x32xf32>
    %30 = arith.truncf %29 : vector<16x32xf32> to vector<16x32xbf16>
    %c0_12 = arith.constant 0 : index
    %c0_13 = arith.constant 0 : index
    %c0_14 = arith.constant 0 : index
    %31 = vector.load %arg5[%c0_12, %c0_13, %c0_14] : memref<1x32x96xbf16, #tpu.memory_space<vmem>>, vector<1x32x96xbf16>
    %32 = vector.shape_cast %31 : vector<1x32x96xbf16> to vector<32x96xbf16>
    %cst_15 = arith.constant dense<0.000000e+00> : vector<16x96xf32>
    %33 = tpu.matmul %30, %32, %cst_15 {dimension_numbers = #tpu.dot_dimension_numbers<[1], [0], [0], [1], [0, 0, 1, 1], [], []>} : vector<16x32xbf16>, vector<32x96xbf16>, vector<16x96xf32> -> vector<16x96xf32>
    %c0_16 = arith.constant 0 : index
    %c0_17 = arith.constant 0 : index
    %34 = vector.load %arg1[%c0_16, %c0_17] : memref<16x16xf32, #tpu.memory_space<vmem>>, vector<16x16xf32>
    %35 = vector.extract_strided_slice %33 {offsets = [0, 0], sizes = [16, 8], strides = [1, 1]} : vector<16x96xf32> to vector<16x8xf32>
    %36 = vector.extract_strided_slice %33 {offsets = [0, 32], sizes = [16, 8], strides = [1, 1]} : vector<16x96xf32> to vector<16x8xf32>
    %37 = vector.extract_strided_slice %33 {offsets = [0, 64], sizes = [16, 8], strides = [1, 1]} : vector<16x96xf32> to vector<16x8xf32>
    %38 = arith.truncf %35 : vector<16x8xf32> to vector<16x8xbf16>
    %39 = arith.truncf %36 : vector<16x8xf32> to vector<16x8xbf16>
    "tpu.trace_start"() <{level = 10 : i32, message = "qd,kd->qk"}> : () -> ()
    %cst_18 = arith.constant dense<0.000000e+00> : vector<16x16xf32>
    %40 = tpu.matmul %38, %39, %cst_18 {dimension_numbers = #tpu.dot_dimension_numbers<[1], [1], [0], [0], [0, 0, 1, 0], [], []>} : vector<16x8xbf16>, vector<16x8xbf16>, vector<16x16xf32> -> vector<16x16xf32>
    "tpu.trace_stop"() : () -> ()
    %41 = arith.addf %40, %34 : vector<16x16xf32>
    %cst_19 = arith.constant dense<0xFF800000> : vector<16xf32>
    %42 = vector.multi_reduction <maximumf>, %41, %cst_19 [1] : vector<16x16xf32> to vector<16xf32>
    %43 = vector.shape_cast %42 : vector<16xf32> to vector<16x1xf32>
    %44 = vector.broadcast %43 : vector<16x1xf32> to vector<16x16xf32>
    %45 = arith.subf %41, %44 : vector<16x16xf32>
    %46 = math.exp %45 : vector<16x16xf32>
    %cst_20 = arith.constant dense<0.000000e+00> : vector<16xf32>
    %47 = vector.multi_reduction <add>, %46, %cst_20 [1] : vector<16x16xf32> to vector<16xf32>
    %48 = vector.shape_cast %47 : vector<16xf32> to vector<16x1xf32>
    %49 = tpu.reciprocal %48 {approx = true} : vector<16x1xf32> -> vector<16x1xf32>
    %50 = vector.broadcast %49 : vector<16x1xf32> to vector<16x16xf32>
    %51 = arith.mulf %46, %50 : vector<16x16xf32>
    %52 = arith.truncf %51 : vector<16x16xf32> to vector<16x16xbf16>
    %53 = arith.truncf %37 : vector<16x8xf32> to vector<16x8xbf16>
    %cst_21 = arith.constant dense<0.000000e+00> : vector<16x8xf32>
    %54 = tpu.matmul %52, %53, %cst_21 {dimension_numbers = #tpu.dot_dimension_numbers<[1], [0], [0], [1], [0, 0, 1, 1], [], []>} : vector<16x16xbf16>, vector<16x8xbf16>, vector<16x8xf32> -> vector<16x8xf32>
    %55 = vector.extract_strided_slice %33 {offsets = [0, 8], sizes = [16, 8], strides = [1, 1]} : vector<16x96xf32> to vector<16x8xf32>
    %56 = vector.extract_strided_slice %33 {offsets = [0, 40], sizes = [16, 8], strides = [1, 1]} : vector<16x96xf32> to vector<16x8xf32>
    %57 = vector.extract_strided_slice %33 {offsets = [0, 72], sizes = [16, 8], strides = [1, 1]} : vector<16x96xf32> to vector<16x8xf32>
    %58 = arith.truncf %55 : vector<16x8xf32> to vector<16x8xbf16>
    %59 = arith.truncf %56 : vector<16x8xf32> to vector<16x8xbf16>
    "tpu.trace_start"() <{level = 10 : i32, message = "qd,kd->qk"}> : () -> ()
    %cst_22 = arith.constant dense<0.000000e+00> : vector<16x16xf32>
    %60 = tpu.matmul %58, %59, %cst_22 {dimension_numbers = #tpu.dot_dimension_numbers<[1], [1], [0], [0], [0, 0, 1, 0], [], []>} : vector<16x8xbf16>, vector<16x8xbf16>, vector<16x16xf32> -> vector<16x16xf32>
    "tpu.trace_stop"() : () -> ()
    %61 = arith.addf %60, %34 : vector<16x16xf32>
    %cst_23 = arith.constant dense<0xFF800000> : vector<16xf32>
    %62 = vector.multi_reduction <maximumf>, %61, %cst_23 [1] : vector<16x16xf32> to vector<16xf32>
    %63 = vector.shape_cast %62 : vector<16xf32> to vector<16x1xf32>
    %64 = vector.broadcast %63 : vector<16x1xf32> to vector<16x16xf32>
    %65 = arith.subf %61, %64 : vector<16x16xf32>
    %66 = math.exp %65 : vector<16x16xf32>
    %cst_24 = arith.constant dense<0.000000e+00> : vector<16xf32>
    %67 = vector.multi_reduction <add>, %66, %cst_24 [1] : vector<16x16xf32> to vector<16xf32>
    %68 = vector.shape_cast %67 : vector<16xf32> to vector<16x1xf32>
    %69 = tpu.reciprocal %68 {approx = true} : vector<16x1xf32> -> vector<16x1xf32>
    %70 = vector.broadcast %69 : vector<16x1xf32> to vector<16x16xf32>
    %71 = arith.mulf %66, %70 : vector<16x16xf32>
    %72 = arith.truncf %71 : vector<16x16xf32> to vector<16x16xbf16>
    %73 = arith.truncf %57 : vector<16x8xf32> to vector<16x8xbf16>
    %cst_25 = arith.constant dense<0.000000e+00> : vector<16x8xf32>
    %74 = tpu.matmul %72, %73, %cst_25 {dimension_numbers = #tpu.dot_dimension_numbers<[1], [0], [0], [1], [0, 0, 1, 1], [], []>} : vector<16x16xbf16>, vector<16x8xbf16>, vector<16x8xf32> -> vector<16x8xf32>
    %75 = vector.extract_strided_slice %33 {offsets = [0, 16], sizes = [16, 8], strides = [1, 1]} : vector<16x96xf32> to vector<16x8xf32>
    %76 = vector.extract_strided_slice %33 {offsets = [0, 48], sizes = [16, 8], strides = [1, 1]} : vector<16x96xf32> to vector<16x8xf32>
    %77 = vector.extract_strided_slice %33 {offsets = [0, 80], sizes = [16, 8], strides = [1, 1]} : vector<16x96xf32> to vector<16x8xf32>
    %78 = arith.truncf %75 : vector<16x8xf32> to vector<16x8xbf16>
    %79 = arith.truncf %76 : vector<16x8xf32> to vector<16x8xbf16>
    "tpu.trace_start"() <{level = 10 : i32, message = "qd,kd->qk"}> : () -> ()
    %cst_26 = arith.constant dense<0.000000e+00> : vector<16x16xf32>
    %80 = tpu.matmul %78, %79, %cst_26 {dimension_numbers = #tpu.dot_dimension_numbers<[1], [1], [0], [0], [0, 0, 1, 0], [], []>} : vector<16x8xbf16>, vector<16x8xbf16>, vector<16x16xf32> -> vector<16x16xf32>
    "tpu.trace_stop"() : () -> ()
    %81 = arith.addf %80, %34 : vector<16x16xf32>
    %cst_27 = arith.constant dense<0xFF800000> : vector<16xf32>
    %82 = vector.multi_reduction <maximumf>, %81, %cst_27 [1] : vector<16x16xf32> to vector<16xf32>
    %83 = vector.shape_cast %82 : vector<16xf32> to vector<16x1xf32>
    %84 = vector.broadcast %83 : vector<16x1xf32> to vector<16x16xf32>
    %85 = arith.subf %81, %84 : vector<16x16xf32>
    %86 = math.exp %85 : vector<16x16xf32>
    %cst_28 = arith.constant dense<0.000000e+00> : vector<16xf32>
    %87 = vector.multi_reduction <add>, %86, %cst_28 [1] : vector<16x16xf32> to vector<16xf32>
    %88 = vector.shape_cast %87 : vector<16xf32> to vector<16x1xf32>
    %89 = tpu.reciprocal %88 {approx = true} : vector<16x1xf32> -> vector<16x1xf32>
    %90 = vector.broadcast %89 : vector<16x1xf32> to vector<16x16xf32>
    %91 = arith.mulf %86, %90 : vector<16x16xf32>
    %92 = arith.truncf %91 : vector<16x16xf32> to vector<16x16xbf16>
    %93 = arith.truncf %77 : vector<16x8xf32> to vector<16x8xbf16>
    %cst_29 = arith.constant dense<0.000000e+00> : vector<16x8xf32>
    %94 = tpu.matmul %92, %93, %cst_29 {dimension_numbers = #tpu.dot_dimension_numbers<[1], [0], [0], [1], [0, 0, 1, 1], [], []>} : vector<16x16xbf16>, vector<16x8xbf16>, vector<16x8xf32> -> vector<16x8xf32>
    %95 = vector.extract_strided_slice %33 {offsets = [0, 24], sizes = [16, 8], strides = [1, 1]} : vector<16x96xf32> to vector<16x8xf32>
    %96 = vector.extract_strided_slice %33 {offsets = [0, 56], sizes = [16, 8], strides = [1, 1]} : vector<16x96xf32> to vector<16x8xf32>
    %97 = vector.extract_strided_slice %33 {offsets = [0, 88], sizes = [16, 8], strides = [1, 1]} : vector<16x96xf32> to vector<16x8xf32>
    %98 = arith.truncf %95 : vector<16x8xf32> to vector<16x8xbf16>
    %99 = arith.truncf %96 : vector<16x8xf32> to vector<16x8xbf16>
    "tpu.trace_start"() <{level = 10 : i32, message = "qd,kd->qk"}> : () -> ()
    %cst_30 = arith.constant dense<0.000000e+00> : vector<16x16xf32>
    %100 = tpu.matmul %98, %99, %cst_30 {dimension_numbers = #tpu.dot_dimension_numbers<[1], [1], [0], [0], [0, 0, 1, 0], [], []>} : vector<16x8xbf16>, vector<16x8xbf16>, vector<16x16xf32> -> vector<16x16xf32>
    "tpu.trace_stop"() : () -> ()
    %101 = arith.addf %100, %34 : vector<16x16xf32>
    %cst_31 = arith.constant dense<0xFF800000> : vector<16xf32>
    %102 = vector.multi_reduction <maximumf>, %101, %cst_31 [1] : vector<16x16xf32> to vector<16xf32>
    %103 = vector.shape_cast %102 : vector<16xf32> to vector<16x1xf32>
    %104 = vector.broadcast %103 : vector<16x1xf32> to vector<16x16xf32>
    %105 = arith.subf %101, %104 : vector<16x16xf32>
    %106 = math.exp %105 : vector<16x16xf32>
    %cst_32 = arith.constant dense<0.000000e+00> : vector<16xf32>
    %107 = vector.multi_reduction <add>, %106, %cst_32 [1] : vector<16x16xf32> to vector<16xf32>
    %108 = vector.shape_cast %107 : vector<16xf32> to vector<16x1xf32>
    %109 = tpu.reciprocal %108 {approx = true} : vector<16x1xf32> -> vector<16x1xf32>
    %110 = vector.broadcast %109 : vector<16x1xf32> to vector<16x16xf32>
    %111 = arith.mulf %106, %110 : vector<16x16xf32>
    %112 = arith.truncf %111 : vector<16x16xf32> to vector<16x16xbf16>
    %113 = arith.truncf %97 : vector<16x8xf32> to vector<16x8xbf16>
    %cst_33 = arith.constant dense<0.000000e+00> : vector<16x8xf32>
    %114 = tpu.matmul %112, %113, %cst_33 {dimension_numbers = #tpu.dot_dimension_numbers<[1], [0], [0], [1], [0, 0, 1, 1], [], []>} : vector<16x16xbf16>, vector<16x8xbf16>, vector<16x8xf32> -> vector<16x8xf32>
    %115 = tpu.concatenate %54, %74, %94, %114 in 1 : vector<16x8xf32>, vector<16x8xf32>, vector<16x8xf32>, vector<16x8xf32> -> vector<16x32xf32>
    %116 = arith.truncf %115 : vector<16x32xf32> to vector<16x32xbf16>
    %c0_34 = arith.constant 0 : index
    %c0_35 = arith.constant 0 : index
    %c0_36 = arith.constant 0 : index
    %117 = vector.load %arg6[%c0_34, %c0_35, %c0_36] : memref<1x32x32xbf16, #tpu.memory_space<vmem>>, vector<1x32x32xbf16>
    %118 = vector.shape_cast %117 : vector<1x32x32xbf16> to vector<32x32xbf16>
    %cst_37 = arith.constant dense<0.000000e+00> : vector<16x32xf32>
    %119 = tpu.matmul %116, %118, %cst_37 {dimension_numbers = #tpu.dot_dimension_numbers<[1], [0], [0], [1], [0, 0, 1, 1], [], []>} : vector<16x32xbf16>, vector<32x32xbf16>, vector<16x32xf32> -> vector<16x32xf32>
    %c0_38 = arith.constant 0 : index
    %c0_39 = arith.constant 0 : index
    %c0_40 = arith.constant 0 : index
    %120 = vector.load %arg7[%c0_38, %c0_39, %c0_40] : memref<1x1x32xf32, #tpu.memory_space<vmem>>, vector<1x1x32xf32>
    %121 = vector.shape_cast %120 : vector<1x1x32xf32> to vector<1x32xf32>
    %122 = vector.broadcast %121 : vector<1x32xf32> to vector<16x32xf32>
    %123 = arith.addf %119, %122 : vector<16x32xf32>
    %124 = arith.addf %3, %123 : vector<16x32xf32>
    %c0_41 = arith.constant 0 : index
    %c0_42 = arith.constant 0 : index
    %c0_43 = arith.constant 0 : index
    %125 = vector.load %arg8[%c0_41, %c0_42, %c0_43] : memref<1x1x32xf32, #tpu.memory_space<vmem>>, vector<1x1x32xf32>
    %126 = vector.shape_cast %125 : vector<1x1x32xf32> to vector<1x32xf32>
    %c0_44 = arith.constant 0 : index
    %c0_45 = arith.constant 0 : index
    %c0_46 = arith.constant 0 : index
    %127 = vector.load %arg9[%c0_44, %c0_45, %c0_46] : memref<1x1x32xf32, #tpu.memory_space<vmem>>, vector<1x1x32xf32>
    %128 = vector.shape_cast %127 : vector<1x1x32xf32> to vector<1x32xf32>
    %cst_47 = arith.constant dense<0.000000e+00> : vector<16xf32>
    %129 = vector.multi_reduction <add>, %124, %cst_47 [1] : vector<16x32xf32> to vector<16xf32>
    %130 = vector.shape_cast %129 : vector<16xf32> to vector<16x1xf32>
    %131 = arith.mulf %124, %124 : vector<16x32xf32>
    %cst_48 = arith.constant dense<0.000000e+00> : vector<16xf32>
    %132 = vector.multi_reduction <add>, %131, %cst_48 [1] : vector<16x32xf32> to vector<16xf32>
    %133 = vector.shape_cast %132 : vector<16xf32> to vector<16x1xf32>
    %cst_49 = arith.constant 3.125000e-02 : f32
    %134 = vector.broadcast %cst_49 : f32 to vector<16x1xf32>
    %135 = arith.mulf %130, %134 : vector<16x1xf32>
    %cst_50 = arith.constant 3.125000e-02 : f32
    %136 = vector.broadcast %cst_50 : f32 to vector<16x1xf32>
    %137 = arith.mulf %133, %136 : vector<16x1xf32>
    %138 = arith.mulf %135, %135 : vector<16x1xf32>
    %139 = arith.subf %137, %138 : vector<16x1xf32>
    %140 = vector.broadcast %135 : vector<16x1xf32> to vector<16x32xf32>
    %141 = arith.subf %124, %140 : vector<16x32xf32>
    %cst_51 = arith.constant 9.99999974E-6 : f32
    %142 = vector.broadcast %cst_51 : f32 to vector<16x1xf32>
    %143 = arith.addf %139, %142 : vector<16x1xf32>
    %144 = math.rsqrt %143 : vector<16x1xf32>
    %145 = vector.broadcast %144 : vector<16x1xf32> to vector<16x32xf32>
    %146 = arith.mulf %141, %145 : vector<16x32xf32>
    %147 = vector.broadcast %126 : vector<1x32xf32> to vector<16x32xf32>
    %148 = arith.mulf %146, %147 : vector<16x32xf32>
    %149 = vector.broadcast %128 : vector<1x32xf32> to vector<16x32xf32>
    %150 = arith.addf %148, %149 : vector<16x32xf32>
    %151 = arith.truncf %150 : vector<16x32xf32> to vector<16x32xbf16>
    %c0_52 = arith.constant 0 : index
    %c0_53 = arith.constant 0 : index
    %c0_54 = arith.constant 0 : index
    %152 = vector.load %arg10[%c0_52, %c0_53, %c0_54] : memref<1x32x64xbf16, #tpu.memory_space<vmem>>, vector<1x32x64xbf16>
    %153 = vector.shape_cast %152 : vector<1x32x64xbf16> to vector<32x64xbf16>
    %cst_55 = arith.constant dense<0.000000e+00> : vector<16x64xf32>
    %154 = tpu.matmul %151, %153, %cst_55 {dimension_numbers = #tpu.dot_dimension_numbers<[1], [0], [0], [1], [0, 0, 1, 1], [], []>} : vector<16x32xbf16>, vector<32x64xbf16>, vector<16x64xf32> -> vector<16x64xf32>
    %c0_56 = arith.constant 0 : index
    %c0_57 = arith.constant 0 : index
    %c0_58 = arith.constant 0 : index
    %155 = vector.load %arg11[%c0_56, %c0_57, %c0_58] : memref<1x1x64xf32, #tpu.memory_space<vmem>>, vector<1x1x64xf32>
    %156 = vector.shape_cast %155 : vector<1x1x64xf32> to vector<1x64xf32>
    %157 = vector.broadcast %156 : vector<1x64xf32> to vector<16x64xf32>
    %158 = arith.addf %154, %157 : vector<16x64xf32>
    %159 = arith.mulf %158, %158 : vector<16x64xf32>
    %160 = arith.mulf %158, %159 : vector<16x64xf32>
    %cst_59 = arith.constant 4.471500e-02 : f32
    %161 = vector.broadcast %cst_59 : f32 to vector<16x64xf32>
    %162 = arith.mulf %161, %160 : vector<16x64xf32>
    %163 = arith.addf %158, %162 : vector<16x64xf32>
    %cst_60 = arith.constant 0.797884583 : f32
    %164 = vector.broadcast %cst_60 : f32 to vector<16x64xf32>
    %165 = arith.mulf %164, %163 : vector<16x64xf32>
    %166 = math.tanh %165 : vector<16x64xf32>
    %cst_61 = arith.constant 1.000000e+00 : f32
    %167 = vector.broadcast %cst_61 : f32 to vector<16x64xf32>
    %168 = arith.addf %167, %166 : vector<16x64xf32>
    %cst_62 = arith.constant 5.000000e-01 : f32
    %169 = vector.broadcast %cst_62 : f32 to vector<16x64xf32>
    %170 = arith.mulf %169, %168 : vector<16x64xf32>
    %171 = arith.mulf %158, %170 : vector<16x64xf32>
    %172 = arith.truncf %171 : vector<16x64xf32> to vector<16x64xbf16>
    %c0_63 = arith.constant 0 : index
    %c0_64 = arith.constant 0 : index
    %c0_65 = arith.constant 0 : index
    %173 = vector.load %arg12[%c0_63, %c0_64, %c0_65] : memref<1x64x32xbf16, #tpu.memory_space<vmem>>, vector<1x64x32xbf16>
    %174 = vector.shape_cast %173 : vector<1x64x32xbf16> to vector<64x32xbf16>
    %cst_66 = arith.constant dense<0.000000e+00> : vector<16x32xf32>
    %175 = tpu.matmul %172, %174, %cst_66 {dimension_numbers = #tpu.dot_dimension_numbers<[1], [0], [0], [1], [0, 0, 1, 1], [], []>} : vector<16x64xbf16>, vector<64x32xbf16>, vector<16x32xf32> -> vector<16x32xf32>
    %c0_67 = arith.constant 0 : index
    %c0_68 = arith.constant 0 : index
    %c0_69 = arith.constant 0 : index
    %176 = vector.load %arg13[%c0_67, %c0_68, %c0_69] : memref<1x1x32xf32, #tpu.memory_space<vmem>>, vector<1x1x32xf32>
    %177 = vector.shape_cast %176 : vector<1x1x32xf32> to vector<1x32xf32>
    %178 = vector.broadcast %177 : vector<1x32xf32> to vector<16x32xf32>
    %179 = arith.addf %175, %178 : vector<16x32xf32>
    %180 = arith.addf %124, %179 : vector<16x32xf32>
    %c0_70 = arith.constant 0 : index
    %c0_71 = arith.constant 0 : index
    %181 = vector.load %arg16[%c0_70, %c0_71] : memref<16x32xf32, #tpu.memory_space<vmem>>, vector<16x32xf32>
    tpu.vector_store %arg16[%c0_70, %c0_71], %180 {strides = array<i32>} : memref<16x32xf32, #tpu.memory_space<vmem>>, vector<16x32xf32>,
    %c1_i32 = arith.constant 1 : i32
    %182 = arith.cmpi eq, %arg0, %c1_i32 : i32
    %183 = arith.extui %182 : i1 to i32
    %c0_i32_72 = arith.constant 0 : i32
    %184 = arith.cmpi ne, %183, %c0_i32_72 : i32
    scf.if %184 {
      %c0_73 = arith.constant 0 : index
      %c0_74 = arith.constant 0 : index
      %185 = vector.load %arg14[%c0_73, %c0_74] : memref<1x32xf32, #tpu.memory_space<vmem>>, vector<1x32xf32>
      %c0_75 = arith.constant 0 : index
      %c0_76 = arith.constant 0 : index
      %186 = vector.load %arg15[%c0_75, %c0_76] : memref<1x32xf32, #tpu.memory_space<vmem>>, vector<1x32xf32>
      %cst_77 = arith.constant dense<0.000000e+00> : vector<16xf32>
      %187 = vector.multi_reduction <add>, %180, %cst_77 [1] : vector<16x32xf32> to vector<16xf32>
      %188 = vector.shape_cast %187 : vector<16xf32> to vector<16x1xf32>
      %189 = arith.mulf %180, %180 : vector<16x32xf32>
      %cst_78 = arith.constant dense<0.000000e+00> : vector<16xf32>
      %190 = vector.multi_reduction <add>, %189, %cst_78 [1] : vector<16x32xf32> to vector<16xf32>
      %191 = vector.shape_cast %190 : vector<16xf32> to vector<16x1xf32>
      %cst_79 = arith.constant 3.125000e-02 : f32
      %192 = vector.broadcast %cst_79 : f32 to vector<16x1xf32>
      %193 = arith.mulf %188, %192 : vector<16x1xf32>
      %cst_80 = arith.constant 3.125000e-02 : f32
      %194 = vector.broadcast %cst_80 : f32 to vector<16x1xf32>
      %195 = arith.mulf %191, %194 : vector<16x1xf32>
      %196 = arith.mulf %193, %193 : vector<16x1xf32>
      %197 = arith.subf %195, %196 : vector<16x1xf32>
      %198 = vector.broadcast %193 : vector<16x1xf32> to vector<16x32xf32>
      %199 = arith.subf %180, %198 : vector<16x32xf32>
      %cst_81 = arith.constant 9.99999974E-6 : f32
      %200 = vector.broadcast %cst_81 : f32 to vector<16x1xf32>
      %201 = arith.addf %197, %200 : vector<16x1xf32>
      %202 = math.rsqrt %201 : vector<16x1xf32>
      %203 = vector.broadcast %202 : vector<16x1xf32> to vector<16x32xf32>
      %204 = arith.mulf %199, %203 : vector<16x32xf32>
      %205 = vector.broadcast %185 : vector<1x32xf32> to vector<16x32xf32>
      %206 = arith.mulf %204, %205 : vector<16x32xf32>
      %207 = vector.broadcast %186 : vector<1x32xf32> to vector<16x32xf32>
      %208 = arith.addf %206, %207 : vector<16x32xf32>
      %c0_82 = arith.constant 0 : index
      %c0_83 = arith.constant 0 : index
      %209 = vector.load %arg16[%c0_82, %c0_83] : memref<16x32xf32, #tpu.memory_space<vmem>>, vector<16x32xf32>
      tpu.vector_store %arg16[%c0_82, %c0_83], %208 {strides = array<i32>} : memref<16x32xf32, #tpu.memory_space<vmem>>, vector<16x32xf32>,
    } else {
    }
    return
  }
  func.func @transform_0(%arg0: i32) -> (i32, i32) {
    %c0_i32 = arith.constant 0 : i32
    %c0_i32_0 = arith.constant 0 : i32
    %c0_i32_1 = arith.constant 0 : i32
    return %c0_i32, %c0_i32_0 : i32, i32
  }
  func.func @transform_1(%arg0: i32) -> (i32, i32) {
    %c0_i32 = arith.constant 0 : i32
    %c0_i32_0 = arith.constant 0 : i32
    %c0_i32_1 = arith.constant 0 : i32
    return %c0_i32, %c0_i32_0 : i32, i32
  }
  func.func @transform_2(%arg0: i32) -> (i32, i32, i32) {
    %c0_i32 = arith.constant 0 : i32
    %c0_i32_0 = arith.constant 0 : i32
    %c0_i32_1 = arith.constant 0 : i32
    return %arg0, %c0_i32, %c0_i32_0 : i32, i32, i32
  }
  func.func @transform_3(%arg0: i32) -> (i32, i32, i32) {
    %c0_i32 = arith.constant 0 : i32
    %c0_i32_0 = arith.constant 0 : i32
    %c0_i32_1 = arith.constant 0 : i32
    return %arg0, %c0_i32, %c0_i32_0 : i32, i32, i32
  }
  func.func @transform_4(%arg0: i32) -> (i32, i32, i32) {
    %c0_i32 = arith.constant 0 : i32
    %c0_i32_0 = arith.constant 0 : i32
    %c0_i32_1 = arith.constant 0 : i32
    return %arg0, %c0_i32, %c0_i32_0 : i32, i32, i32
  }
  func.func @transform_5(%arg0: i32) -> (i32, i32, i32) {
    %c0_i32 = arith.constant 0 : i32
    %c0_i32_0 = arith.constant 0 : i32
    %c0_i32_1 = arith.constant 0 : i32
    return %arg0, %c0_i32, %c0_i32_0 : i32, i32, i32
  }
  func.func @transform_6(%arg0: i32) -> (i32, i32, i32) {
    %c0_i32 = arith.constant 0 : i32
    %c0_i32_0 = arith.constant 0 : i32
    %c0_i32_1 = arith.constant 0 : i32
    return %arg0, %c0_i32, %c0_i32_0 : i32, i32, i32
  }
  func.func @transform_7(%arg0: i32) -> (i32, i32, i32) {
    %c0_i32 = arith.constant 0 : i32
    %c0_i32_0 = arith.constant 0 : i32
    %c0_i32_1 = arith.constant 0 : i32
    return %arg0, %c0_i32, %c0_i32_0 : i32, i32, i32
  }
  func.func @transform_8(%arg0: i32) -> (i32, i32, i32) {
    %c0_i32 = arith.constant 0 : i32
    %c0_i32_0 = arith.constant 0 : i32
    %c0_i32_1 = arith.constant 0 : i32
    return %arg0, %c0_i32, %c0_i32_0 : i32, i32, i32
  }
  func.func @transform_9(%arg0: i32) -> (i32, i32, i32) {
    %c0_i32 = arith.constant 0 : i32
    %c0_i32_0 = arith.constant 0 : i32
    %c0_i32_1 = arith.constant 0 : i32
    return %arg0, %c0_i32, %c0_i32_0 : i32, i32, i32
  }
  func.func @transform_10(%arg0: i32) -> (i32, i32, i32) {
    %c0_i32 = arith.constant 0 : i32
    %c0_i32_0 = arith.constant 0 : i32
    %c0_i32_1 = arith.constant 0 : i32
    return %arg0, %c0_i32, %c0_i32_0 : i32, i32, i32
  }
  func.func @transform_11(%arg0: i32) -> (i32, i32, i32) {
    %c0_i32 = arith.constant 0 : i32
    %c0_i32_0 = arith.constant 0 : i32
    %c0_i32_1 = arith.constant 0 : i32
    return %arg0, %c0_i32, %c0_i32_0 : i32, i32, i32
  }
  func.func @transform_12(%arg0: i32) -> (i32, i32, i32) {
    %c0_i32 = arith.constant 0 : i32
    %c0_i32_0 = arith.constant 0 : i32
    %c0_i32_1 = arith.constant 0 : i32
    return %arg0, %c0_i32, %c0_i32_0 : i32, i32, i32
  }
  func.func @transform_13(%arg0: i32) -> (i32, i32) {
    %c0_i32 = arith.constant 0 : i32
    %c0_i32_0 = arith.constant 0 : i32
    %c0_i32_1 = arith.constant 0 : i32
    return %c0_i32, %c0_i32_0 : i32, i32
  }
  func.func @transform_14(%arg0: i32) -> (i32, i32) {
    %c0_i32 = arith.constant 0 : i32
    %c0_i32_0 = arith.constant 0 : i32
    %c0_i32_1 = arith.constant 0 : i32
    return %c0_i32, %c0_i32_0 : i32, i32
  }
  func.func @transform_15(%arg0: i32) -> (i32, i32) {
    %c0_i32 = arith.constant 0 : i32
    %c0_i32_0 = arith.constant 0 : i32
    %c0_i32_1 = arith.constant 0 : i32
    return %c0_i32, %c0_i32_0 : i32, i32
  }
}

</mosaic_0001>

<llo_original>
// kernel: tpu_custom_call.1
$region0: #{tpu_custom_call.1}
  #allocation0 [shape = 'u32[]', space=smem, size = 0x4, offset = 0x4, fixed_abs, tag = 'smem constant byte address 0x4 - core index']
  #allocation1 [shape = 'u32[144,128]{1,0:T(1,128)}', space=vmem, size = 0x12000, scoped, tag = 'internal scratch']
  %s0 = inlined_call_operand.hbm [shape: f32[16,16], index: 0, kind: input, shape index: {}]
  %s1 = inlined_call_operand.hbm [shape: f32[16,32], index: 1, kind: input, shape index: {}]
  %s2 = inlined_call_operand.vmem [shape: f32[2,1,32], index: 2, kind: input, shape index: {}]
  %s3 = inlined_call_operand.vmem [shape: f32[2,1,32], index: 3, kind: input, shape index: {}]
  %s4 = inlined_call_operand.vmem [shape: bf16[2,32,96], index: 4, kind: input, shape index: {}]
  %s5 = inlined_call_operand.vmem [shape: bf16[2,32,32], index: 5, kind: input, shape index: {}]
  %s6 = inlined_call_operand.vmem [shape: f32[2,1,32], index: 6, kind: input, shape index: {}]
  %s7 = inlined_call_operand.vmem [shape: f32[2,1,32], index: 7, kind: input, shape index: {}]
  %s8 = inlined_call_operand.hbm [shape: f32[2,1,32], index: 8, kind: input, shape index: {}]
  %s9 = inlined_call_operand.vmem [shape: bf16[2,32,64], index: 9, kind: input, shape index: {}]
  %s10 = inlined_call_operand.hbm [shape: f32[2,1,64], index: 10, kind: input, shape index: {}]
  %s11 = inlined_call_operand.vmem [shape: bf16[2,64,32], index: 11, kind: input, shape index: {}]
  %s12 = inlined_call_operand.vmem [shape: f32[2,1,32], index: 12, kind: input, shape index: {}]
  %s13 = inlined_call_operand.vmem [shape: f32[1,32], index: 13, kind: input, shape index: {}]
  %s14 = inlined_call_operand.vmem [shape: f32[1,32], index: 14, kind: input, shape index: {}]
  %s15 = inlined_call_operand.hbm [shape: f32[16,32], index: 15, kind: output, shape index: {}]
  %s16 = sld [smem:[#allocation0]]
  $region117: #{tpu_custom_call.1} parent=0
    _
  %s18 = ssub.s32 1, %s16
  %s19 = scalar_select 0, %s18, %s16
  $region1: #{tpu_custom_call.1} parent=0
    #allocation2 [shape = 'u8[8192]{0}', space=vmem, size = 0x2000, scoped, tag = 'input window, operand 0, single buffered']
    #allocation3 [shape = 's32[2]{0}', space=sflag, size = 0x8, scoped, tag = 'scoped memory for tpu_custom_call.1']
    #allocation4 [shape = 's32[2]{0}', space=sflag, size = 0x8, scoped, tag = 'scoped memory for tpu_custom_call.1']
    #allocation5 [shape = 'u8[8192]{0}', space=vmem, size = 0x2000, scoped, tag = 'input window, operand 1, single buffered']
    #allocation6 [shape = 's32[1]{0}', space=sflag, size = 0x4, scoped, tag = 'scoped memory for tpu_custom_call.1']
    #allocation7 [shape = 'u8[1024]{0}', space=vmem, size = 0x400, scoped, tag = 'input window, operand 8']
    #allocation8 [shape = 'u8[1024]{0}', space=vmem, size = 0x400, scoped, tag = 'input window, operand 10']
    #allocation9 [shape = 'u8[8192]{0}', space=vmem, size = 0x2000, scoped, tag = 'output window, operand 0, single buffered']
    %20 = vsyncpa [#allocation3], 0
    %21 = vsyncpa [#allocation6], 0
    %22 = vsyncpa [#allocation4], 0
    loop: start=0, step=1, limit=4
    $region2: #{tpu_custom_call.1} parent=1 // loop_pre_header
      _
    $region3: #{tpu_custom_call.1} parent=1 // loop_header
      %s24 = sphi 0, %s28
      %p25 = scmp.ge.s32.totalorder %s24, 4
      %s32 = sphi 0, %s32
      %s34 = sphi 0, %s32
      %s35 = sphi 0, %s34
      %s49 = sphi 0, %s35
      %s53 = sphi 0, %s53
      %s55 = sphi 0, %s53
      %s56 = sphi 0, %s55
      %s70 = sphi 0, %s56
      %s76 = sphi 0, %s78
      %s79 = sphi 0, %s76
      %s80 = sphi 0, %s79
      %s96 = sphi 0, %s80
      %s102 = sphi 0, %s104
      %s105 = sphi 0, %s102
      %s106 = sphi 0, %s105
      %s122 = sphi 0, %s106
      %s128 = sphi 0, %s130
      %s131 = sphi 0, %s128
      %s132 = sphi 0, %s131
      %s148 = sphi 0, %s132
      %s154 = sphi 0, %s156
      %s157 = sphi 0, %s154
      %s158 = sphi 0, %s157
      %s174 = sphi 0, %s158
      %s180 = sphi 0, %s182
      %s183 = sphi 0, %s180
      %s184 = sphi 0, %s183
      %s200 = sphi 0, %s184
      %s206 = sphi 0, %s208
      %s209 = sphi 0, %s206
      %s210 = sphi 0, %s209
      %s226 = sphi 0, %s210
      %s232 = sphi 0, %s234
      %s235 = sphi 0, %s232
      %s236 = sphi 0, %s235
      %s252 = sphi 0, %s236
      %s258 = sphi 0, %s260
      %s261 = sphi 0, %s258
      %s262 = sphi 0, %s261
      %s278 = sphi 0, %s262
      %s284 = sphi 0, %s286
      %s287 = sphi 0, %s284
      %s288 = sphi 0, %s287
      %s304 = sphi 0, %s288
      %s310 = sphi 0, %s312
      %s313 = sphi 0, %s310
      %s314 = sphi 0, %s313
      %s330 = sphi 0, %s314
      %s336 = sphi 0, %s338
      %s339 = sphi 0, %s336
      %s340 = sphi 0, %s339
      %s356 = sphi 0, %s340
      %s360 = sphi 0, %s360
      %s362 = sphi 0, %s360
      %s363 = sphi 0, %s362
      %s377 = sphi 0, %s363
      %s381 = sphi 0, %s381
      %s383 = sphi 0, %s381
      %s384 = sphi 0, %s383
      %s398 = sphi 0, %s384
      %s402 = sphi 0, %s402
      %s404 = sphi 0, %s402
      %s405 = sphi 0, %s404
      %s419 = sphi 0, %s405
    $region4: #{tpu_custom_call.1} parent=1 // loop_header_branch
      %27 = sbr.rel (%p25) target = $region8
    $region5: #{tpu_custom_call.1} parent=1 // loop_body
      %s29 = ssub.s32 %s24, 1
      %s30 = ssub.s32 %s24, 2
      %s31 = sadd.s32 %s24, 1
      %s33 = sadd.s32 %s32, 1
      %p36 = scmp.eq.s32.totalorder %s24, 1
      %p37 = scmp.ne.s32.totalorder %s32, %s34
      %p38 = scmp.eq.s32.totalorder %s24, 0
      %p39 = por %p37, %p38
      %p40 = scmp.ne.s32.totalorder %s32, %s34
      %p41 = scmp.eq.s32.totalorder %s29, 1
      %p42 = por %p40, %p41
      %p43 = scmp.ne.s32.totalorder %s34, %s35
      %p44 = scmp.eq.s32.totalorder %s29, 0
      %p45 = por %p43, %p44
      %p46 = scmp.ne.s32.totalorder %s34, %s35
      %p47 = scmp.eq.s32.totalorder %s30, 1
      %p48 = por %p46, %p47
      %p50 = scmp.ne.s32.totalorder %s35, %s49
      %p51 = scmp.eq.s32.totalorder %s30, 0
      %p52 = por %p50, %p51
      %s54 = sadd.s32 %s53, 1
      %p57 = scmp.eq.s32.totalorder %s24, 1
      %p58 = scmp.ne.s32.totalorder %s53, %s55
      %p59 = scmp.eq.s32.totalorder %s24, 0
      %p60 = por %p58, %p59
      %p61 = scmp.ne.s32.totalorder %s53, %s55
      %p62 = scmp.eq.s32.totalorder %s29, 1
      %p63 = por %p61, %p62
      %p64 = scmp.ne.s32.totalorder %s55, %s56
      %p65 = scmp.eq.s32.totalorder %s29, 0
      %p66 = por %p64, %p65
      %p67 = scmp.ne.s32.totalorder %s55, %s56
      %p68 = scmp.eq.s32.totalorder %s30, 1
      %p69 = por %p67, %p68
      %p71 = scmp.ne.s32.totalorder %s56, %s70
      %p72 = scmp.eq.s32.totalorder %s30, 0
      %p73 = por %p71, %p72
      %s74 = ssub.s32 %s24, %s31
      %p75 = scmp.eq.s32.totalorder %s74, 0
      %s77 = sadd.s32 %s76, 1
      %s78 = scalar_select %p75, %s76, %s77
      %p81 = pneg %p75
      %p82 = scmp.eq.s32.totalorder %s24, 1
      %p83 = por %p81, %p82
      %p84 = scmp.ne.s32.totalorder %s76, %s79
      %p85 = scmp.eq.s32.totalorder %s24, 0
      %p86 = por %p84, %p85
      %p87 = scmp.ne.s32.totalorder %s76, %s79
      %p88 = scmp.eq.s32.totalorder %s29, 1
      %p89 = por %p87, %p88
      %p90 = scmp.ne.s32.totalorder %s79, %s80
      %p91 = scmp.eq.s32.totalorder %s29, 0
      %p92 = por %p90, %p91
      %p93 = scmp.ne.s32.totalorder %s79, %s80
      %p94 = scmp.eq.s32.totalorder %s30, 1
      %p95 = por %p93, %p94
      %p97 = scmp.ne.s32.totalorder %s80, %s96
      %p98 = scmp.eq.s32.totalorder %s30, 0
      %p99 = por %p97, %p98
      %s100 = ssub.s32 %s24, %s31
      %p101 = scmp.eq.s32.totalorder %s100, 0
      %s103 = sadd.s32 %s102, 1
      %s104 = scalar_select %p101, %s102, %s103
      %p107 = pneg %p101
      %p108 = scmp.eq.s32.totalorder %s24, 1
      %p109 = por %p107, %p108
      %p110 = scmp.ne.s32.totalorder %s102, %s105
      %p111 = scmp.eq.s32.totalorder %s24, 0
      %p112 = por %p110, %p111
      %p113 = scmp.ne.s32.totalorder %s102, %s105
      %p114 = scmp.eq.s32.totalorder %s29, 1
      %p115 = por %p113, %p114
      %p116 = scmp.ne.s32.totalorder %s105, %s106
      %p117 = scmp.eq.s32.totalorder %s29, 0
      %p118 = por %p116, %p117
      %p119 = scmp.ne.s32.totalorder %s105, %s106
      %p120 = scmp.eq.s32.totalorder %s30, 1
      %p121 = por %p119, %p120
      %p123 = scmp.ne.s32.totalorder %s106, %s122
      %p124 = scmp.eq.s32.totalorder %s30, 0
      %p125 = por %p123, %p124
      %s126 = ssub.s32 %s24, %s31
      %p127 = scmp.eq.s32.totalorder %s126, 0
      %s129 = sadd.s32 %s128, 1
      %s130 = scalar_select %p127, %s128, %s129
      %p133 = pneg %p127
      %p134 = scmp.eq.s32.totalorder %s24, 1
      %p135 = por %p133, %p134
      %p136 = scmp.ne.s32.totalorder %s128, %s131
      %p137 = scmp.eq.s32.totalorder %s24, 0
      %p138 = por %p136, %p137
      %p139 = scmp.ne.s32.totalorder %s128, %s131
      %p140 = scmp.eq.s32.totalorder %s29, 1
      %p141 = por %p139, %p140
      %p142 = scmp.ne.s32.totalorder %s131, %s132
      %p143 = scmp.eq.s32.totalorder %s29, 0
      %p144 = por %p142, %p143
      %p145 = scmp.ne.s32.totalorder %s131, %s132
      %p146 = scmp.eq.s32.totalorder %s30, 1
      %p147 = por %p145, %p146
      %p149 = scmp.ne.s32.totalorder %s132, %s148
      %p150 = scmp.eq.s32.totalorder %s30, 0
      %p151 = por %p149, %p150
      %s152 = ssub.s32 %s24, %s31
      %p153 = scmp.eq.s32.totalorder %s152, 0
      %s155 = sadd.s32 %s154, 1
      %s156 = scalar_select %p153, %s154, %s155
      %p159 = pneg %p153
      %p160 = scmp.eq.s32.totalorder %s24, 1
      %p161 = por %p159, %p160
      %p162 = scmp.ne.s32.totalorder %s154, %s157
      %p163 = scmp.eq.s32.totalorder %s24, 0
      %p164 = por %p162, %p163
      %p165 = scmp.ne.s32.totalorder %s154, %s157
      %p166 = scmp.eq.s32.totalorder %s29, 1
      %p167 = por %p165, %p166
      %p168 = scmp.ne.s32.totalorder %s157, %s158
      %p169 = scmp.eq.s32.totalorder %s29, 0
      %p170 = por %p168, %p169
      %p171 = scmp.ne.s32.totalorder %s157, %s158
      %p172 = scmp.eq.s32.totalorder %s30, 1
      %p173 = por %p171, %p172
      %p175 = scmp.ne.s32.totalorder %s158, %s174
      %p176 = scmp.eq.s32.totalorder %s30, 0
      %p177 = por %p175, %p176
      %s178 = ssub.s32 %s24, %s31
      %p179 = scmp.eq.s32.totalorder %s178, 0
      %s181 = sadd.s32 %s180, 1
      %s182 = scalar_select %p179, %s180, %s181
      %p185 = pneg %p179
      %p186 = scmp.eq.s32.totalorder %s24, 1
      %p187 = por %p185, %p186
      %p188 = scmp.ne.s32.totalorder %s180, %s183
      %p189 = scmp.eq.s32.totalorder %s24, 0
      %p190 = por %p188, %p189
      %p191 = scmp.ne.s32.totalorder %s180, %s183
      %p192 = scmp.eq.s32.totalorder %s29, 1
      %p193 = por %p191, %p192
      %p194 = scmp.ne.s32.totalorder %s183, %s184
      %p195 = scmp.eq.s32.totalorder %s29, 0
      %p196 = por %p194, %p195
      %p197 = scmp.ne.s32.totalorder %s183, %s184
      %p198 = scmp.eq.s32.totalorder %s30, 1
      %p199 = por %p197, %p198
      %p201 = scmp.ne.s32.totalorder %s184, %s200
      %p202 = scmp.eq.s32.totalorder %s30, 0
      %p203 = por %p201, %p202
      %s204 = ssub.s32 %s24, %s31
      %p205 = scmp.eq.s32.totalorder %s204, 0
      %s207 = sadd.s32 %s206, 1
      %s208 = scalar_select %p205, %s206, %s207
      %p211 = pneg %p205
      %p212 = scmp.eq.s32.totalorder %s24, 1
      %p213 = por %p211, %p212
      %p214 = scmp.ne.s32.totalorder %s206, %s209
      %p215 = scmp.eq.s32.totalorder %s24, 0
      %p216 = por %p214, %p215
      %p217 = scmp.ne.s32.totalorder %s206, %s209
      %p218 = scmp.eq.s32.totalorder %s29, 1
      %p219 = por %p217, %p218
      %p220 = scmp.ne.s32.totalorder %s209, %s210
      %p221 = scmp.eq.s32.totalorder %s29, 0
      %p222 = por %p220, %p221
      %p223 = scmp.ne.s32.totalorder %s209, %s210
      %p224 = scmp.eq.s32.totalorder %s30, 1
      %p225 = por %p223, %p224
      %p227 = scmp.ne.s32.totalorder %s210, %s226
      %p228 = scmp.eq.s32.totalorder %s30, 0
      %p229 = por %p227, %p228
      %s230 = ssub.s32 %s24, %s31
      %p231 = scmp.eq.s32.totalorder %s230, 0
      %s233 = sadd.s32 %s232, 1
      %s234 = scalar_select %p231, %s232, %s233
      %p237 = pneg %p231
      %p238 = scmp.eq.s32.totalorder %s24, 1
      %p239 = por %p237, %p238
      %p240 = scmp.ne.s32.totalorder %s232, %s235
      %p241 = scmp.eq.s32.totalorder %s24, 0
      %p242 = por %p240, %p241
      %p243 = scmp.ne.s32.totalorder %s232, %s235
      %p244 = scmp.eq.s32.totalorder %s29, 1
      %p245 = por %p243, %p244
      %p246 = scmp.ne.s32.totalorder %s235, %s236
      %p247 = scmp.eq.s32.totalorder %s29, 0
      %p248 = por %p246, %p247
      %p249 = scmp.ne.s32.totalorder %s235, %s236
      %p250 = scmp.eq.s32.totalorder %s30, 1
      %p251 = por %p249, %p250
      %p253 = scmp.ne.s32.totalorder %s236, %s252
      %p254 = scmp.eq.s32.totalorder %s30, 0
      %p255 = por %p253, %p254
      %s256 = ssub.s32 %s24, %s31
      %p257 = scmp.eq.s32.totalorder %s256, 0
      %s259 = sadd.s32 %s258, 1
      %s260 = scalar_select %p257, %s258, %s259
      %p263 = pneg %p257
      %p264 = scmp.eq.s32.totalorder %s24, 1
      %p265 = por %p263, %p264
      %p266 = scmp.ne.s32.totalorder %s258, %s261
      %p267 = scmp.eq.s32.totalorder %s24, 0
      %p268 = por %p266, %p267
      %p269 = scmp.ne.s32.totalorder %s258, %s261
      %p270 = scmp.eq.s32.totalorder %s29, 1
      %p271 = por %p269, %p270
      %p272 = scmp.ne.s32.totalorder %s261, %s262
      %p273 = scmp.eq.s32.totalorder %s29, 0
      %p274 = por %p272, %p273
      %p275 = scmp.ne.s32.totalorder %s261, %s262
      %p276 = scmp.eq.s32.totalorder %s30, 1
      %p277 = por %p275, %p276
      %p279 = scmp.ne.s32.totalorder %s262, %s278
      %p280 = scmp.eq.s32.totalorder %s30, 0
      %p281 = por %p279, %p280
      %s282 = ssub.s32 %s24, %s31
      %p283 = scmp.eq.s32.totalorder %s282, 0
      %s285 = sadd.s32 %s284, 1
      %s286 = scalar_select %p283, %s284, %s285
      %p289 = pneg %p283
      %p290 = scmp.eq.s32.totalorder %s24, 1
      %p291 = por %p289, %p290
      %p292 = scmp.ne.s32.totalorder %s284, %s287
      %p293 = scmp.eq.s32.totalorder %s24, 0
      %p294 = por %p292, %p293
      %p295 = scmp.ne.s32.totalorder %s284, %s287
      %p296 = scmp.eq.s32.totalorder %s29, 1
      %p297 = por %p295, %p296
      %p298 = scmp.ne.s32.totalorder %s287, %s288
      %p299 = scmp.eq.s32.totalorder %s29, 0
      %p300 = por %p298, %p299
      %p301 = scmp.ne.s32.totalorder %s287, %s288
      %p302 = scmp.eq.s32.totalorder %s30, 1
      %p303 = por %p301, %p302
      %p305 = scmp.ne.s32.totalorder %s288, %s304
      %p306 = scmp.eq.s32.totalorder %s30, 0
      %p307 = por %p305, %p306
      %s308 = ssub.s32 %s24, %s31
      %p309 = scmp.eq.s32.totalorder %s308, 0
      %s311 = sadd.s32 %s310, 1
      %s312 = scalar_select %p309, %s310, %s311
      %p315 = pneg %p309
      %p316 = scmp.eq.s32.totalorder %s24, 1
      %p317 = por %p315, %p316
      %p318 = scmp.ne.s32.totalorder %s310, %s313
      %p319 = scmp.eq.s32.totalorder %s24, 0
      %p320 = por %p318, %p319
      %p321 = scmp.ne.s32.totalorder %s310, %s313
      %p322 = scmp.eq.s32.totalorder %s29, 1
      %p323 = por %p321, %p322
      %p324 = scmp.ne.s32.totalorder %s313, %s314
      %p325 = scmp.eq.s32.totalorder %s29, 0
      %p326 = por %p324, %p325
      %p327 = scmp.ne.s32.totalorder %s313, %s314
      %p328 = scmp.eq.s32.totalorder %s30, 1
      %p329 = por %p327, %p328
      %p331 = scmp.ne.s32.totalorder %s314, %s330
      %p332 = scmp.eq.s32.totalorder %s30, 0
      %p333 = por %p331, %p332
      %s334 = ssub.s32 %s24, %s31
      %p335 = scmp.eq.s32.totalorder %s334, 0
      %s337 = sadd.s32 %s336, 1
      %s338 = scalar_select %p335, %s336, %s337
      %p341 = pneg %p335
      %p342 = scmp.eq.s32.totalorder %s24, 1
      %p343 = por %p341, %p342
      %p344 = scmp.ne.s32.totalorder %s336, %s339
      %p345 = scmp.eq.s32.totalorder %s24, 0
      %p346 = por %p344, %p345
      %p347 = scmp.ne.s32.totalorder %s336, %s339
      %p348 = scmp.eq.s32.totalorder %s29, 1
      %p349 = por %p347, %p348
      %p350 = scmp.ne.s32.totalorder %s339, %s340
      %p351 = scmp.eq.s32.totalorder %s29, 0
      %p352 = por %p350, %p351
      %p353 = scmp.ne.s32.totalorder %s339, %s340
      %p354 = scmp.eq.s32.totalorder %s30, 1
      %p355 = por %p353, %p354
      %p357 = scmp.ne.s32.totalorder %s340, %s356
      %p358 = scmp.eq.s32.totalorder %s30, 0
      %p359 = por %p357, %p358
      %s361 = sadd.s32 %s360, 1
      %p364 = scmp.eq.s32.totalorder %s24, 1
      %p365 = scmp.ne.s32.totalorder %s360, %s362
      %p366 = scmp.eq.s32.totalorder %s24, 0
      %p367 = por %p365, %p366
      %p368 = scmp.ne.s32.totalorder %s360, %s362
      %p369 = scmp.eq.s32.totalorder %s29, 1
      %p370 = por %p368, %p369
      %p371 = scmp.ne.s32.totalorder %s362, %s363
      %p372 = scmp.eq.s32.totalorder %s29, 0
      %p373 = por %p371, %p372
      %p374 = scmp.ne.s32.totalorder %s362, %s363
      %p375 = scmp.eq.s32.totalorder %s30, 1
      %p376 = por %p374, %p375
      %p378 = scmp.ne.s32.totalorder %s363, %s377
      %p379 = scmp.eq.s32.totalorder %s30, 0
      %p380 = por %p378, %p379
      %s382 = sadd.s32 %s381, 1
      %p385 = scmp.eq.s32.totalorder %s24, 1
      %p386 = scmp.ne.s32.totalorder %s381, %s383
      %p387 = scmp.eq.s32.totalorder %s24, 0
      %p388 = por %p386, %p387
      %p389 = scmp.ne.s32.totalorder %s381, %s383
      %p390 = scmp.eq.s32.totalorder %s29, 1
      %p391 = por %p389, %p390
      %p392 = scmp.ne.s32.totalorder %s383, %s384
      %p393 = scmp.eq.s32.totalorder %s29, 0
      %p394 = por %p392, %p393
      %p395 = scmp.ne.s32.totalorder %s383, %s384
      %p396 = scmp.eq.s32.totalorder %s30, 1
      %p397 = por %p395, %p396
      %p399 = scmp.ne.s32.totalorder %s384, %s398
      %p400 = scmp.eq.s32.totalorder %s30, 0
      %p401 = por %p399, %p400
      %s403 = sadd.s32 %s402, 1
      %p406 = scmp.eq.s32.totalorder %s24, 1
      %p407 = scmp.ne.s32.totalorder %s402, %s404
      %p408 = scmp.eq.s32.totalorder %s24, 0
      %p409 = por %p407, %p408
      %p410 = scmp.ne.s32.totalorder %s402, %s404
      %p411 = scmp.eq.s32.totalorder %s29, 1
      %p412 = por %p410, %p411
      %p413 = scmp.ne.s32.totalorder %s404, %s405
      %p414 = scmp.eq.s32.totalorder %s29, 0
      %p415 = por %p413, %p414
      %p416 = scmp.ne.s32.totalorder %s404, %s405
      %p417 = scmp.eq.s32.totalorder %s30, 1
      %p418 = por %p416, %p417
      %p420 = scmp.ne.s32.totalorder %s405, %s419
      %p421 = scmp.eq.s32.totalorder %s30, 0
      %p422 = por %p420, %p421
      %p423 = scmp.le.s32.totalorder 1, %s24
      %p424 = scmp.lt.s32.totalorder %s24, 3
      %p425 = pnand %p423, %p424
      %p426 = pneg %p425
      // Predicated region
      $region9: #{tpu_custom_call.1} parent=5 // pred_check
        _
      $region10: #{tpu_custom_call.1} parent=5 // pred_check_branch
        %428 = sbr.rel (%p425) target = $region12
      $region11: #{tpu_custom_call.1} parent=5 // pred_region
        %s429 = ssub.s32 %s24, 1
        // Predicated region
        $region13: #{tpu_custom_call.1} parent=11 // pred_check
          %p430 = pneg %p45
        $region14: #{tpu_custom_call.1} parent=11 // pred_check_branch
          %432 = sbr.rel (%p430) target = $region16
        $region15: #{tpu_custom_call.1} parent=11 // pred_region
          %s434 = ssub.s32 256, 256
          %435 = vsyncadd [#allocation3], %s434
          %s436 = sshll.u32 [#allocation2], 4
          %s437 = int_to_ptr.vmem [resolvable:$true] %s436
          %442 = dma.hbm_to_vmem [thread:$0]  %s0, 256, %s437, [#allocation3], 128, 128, 8
        $region16: #{tpu_custom_call.1} parent=11 // pred_fallthru
          _
        // Predicated region
        $region17: #{tpu_custom_call.1} parent=11 // pred_check
          %p443 = pneg %p66
        $region18: #{tpu_custom_call.1} parent=11 // pred_check_branch
          %445 = sbr.rel (%p443) target = $region20
        $region19: #{tpu_custom_call.1} parent=11 // pred_region
          %s447 = ssub.s32 256, 256
          %448 = vsyncadd [#allocation6], %s447
          %s449 = sshll.u32 [#allocation5], 4
          %s450 = int_to_ptr.vmem [resolvable:$true] %s449
          %455 = dma.hbm_to_vmem [thread:$0]  %s1, 256, %s450, [#allocation6], 128, 128, 8
        $region20: #{tpu_custom_call.1} parent=11 // pred_fallthru
          _
        // Predicated region
        $region21: #{tpu_custom_call.1} parent=11 // pred_check
          %p456 = pneg %p373
        $region22: #{tpu_custom_call.1} parent=11 // pred_check_branch
          %458 = sbr.rel (%p456) target = $region24
        $region23: #{tpu_custom_call.1} parent=11 // pred_region
          _
        $region24: #{tpu_custom_call.1} parent=11 // pred_fallthru
          _
        // Predicated region
        $region25: #{tpu_custom_call.1} parent=11 // pred_check
          %p459 = pneg %p394
        $region26: #{tpu_custom_call.1} parent=11 // pred_check_branch
          %461 = sbr.rel (%p459) target = $region28
        $region27: #{tpu_custom_call.1} parent=11 // pred_region
          _
        $region28: #{tpu_custom_call.1} parent=11 // pred_fallthru
          _
      $region12: #{tpu_custom_call.1} parent=5 // pred_fallthru
        _
      %p462 = scmp.lt.s32.totalorder %s24, 2
      // Predicated region
      $region29: #{tpu_custom_call.1} parent=5 // pred_check
        %p463 = pneg %p462
      $region30: #{tpu_custom_call.1} parent=5 // pred_check_branch
        %465 = sbr.rel (%p463) target = $region32
      $region31: #{tpu_custom_call.1} parent=5 // pred_region
        // Predicated region
        $region33: #{tpu_custom_call.1} parent=31 // pred_check
          %p466 = pneg %p86
        $region34: #{tpu_custom_call.1} parent=31 // pred_check_branch
          %468 = sbr.rel (%p466) target = $region36
        $region35: #{tpu_custom_call.1} parent=31 // pred_region
          %p469 = scmp.lt.s32.totalorder %s24, 1
          %s470 = scalar_select %p469, %s24, 1
          %s471 = scalar_lea.vmem %s2, %s470
        $region36: #{tpu_custom_call.1} parent=31 // pred_fallthru
          _
        // Predicated region
        $region37: #{tpu_custom_call.1} parent=31 // pred_check
          %p472 = pneg %p112
        $region38: #{tpu_custom_call.1} parent=31 // pred_check_branch
          %474 = sbr.rel (%p472) target = $region40
        $region39: #{tpu_custom_call.1} parent=31 // pred_region
          %p475 = scmp.lt.s32.totalorder %s24, 1
          %s476 = scalar_select %p475, %s24, 1
          %s477 = scalar_lea.vmem %s3, %s476
        $region40: #{tpu_custom_call.1} parent=31 // pred_fallthru
          _
        // Predicated region
        $region41: #{tpu_custom_call.1} parent=31 // pred_check
          %p478 = pneg %p138
        $region42: #{tpu_custom_call.1} parent=31 // pred_check_branch
          %480 = sbr.rel (%p478) target = $region44
        $region43: #{tpu_custom_call.1} parent=31 // pred_region
          %p481 = scmp.lt.s32.totalorder %s24, 1
          %s482 = scalar_select %p481, %s24, 1
          %s483 = smul.addr %s482, 4
          %s484 = smul.addr %s483, 4
          %s485 = scalar_lea.vmem %s4, %s484
        $region44: #{tpu_custom_call.1} parent=31 // pred_fallthru
          _
        // Predicated region
        $region45: #{tpu_custom_call.1} parent=31 // pred_check
          %p486 = pneg %p164
        $region46: #{tpu_custom_call.1} parent=31 // pred_check_branch
          %488 = sbr.rel (%p486) target = $region48
        $region47: #{tpu_custom_call.1} parent=31 // pred_region
          %p489 = scmp.lt.s32.totalorder %s24, 1
          %s490 = scalar_select %p489, %s24, 1
          %s491 = smul.addr %s490, 4
          %s492 = smul.addr %s491, 4
          %s493 = scalar_lea.vmem %s5, %s492
        $region48: #{tpu_custom_call.1} parent=31 // pred_fallthru
          _
        // Predicated region
        $region49: #{tpu_custom_call.1} parent=31 // pred_check
          %p494 = pneg %p190
        $region50: #{tpu_custom_call.1} parent=31 // pred_check_branch
          %496 = sbr.rel (%p494) target = $region52
        $region51: #{tpu_custom_call.1} parent=31 // pred_region
          %p497 = scmp.lt.s32.totalorder %s24, 1
          %s498 = scalar_select %p497, %s24, 1
          %s499 = scalar_lea.vmem %s6, %s498
        $region52: #{tpu_custom_call.1} parent=31 // pred_fallthru
          _
        // Predicated region
        $region53: #{tpu_custom_call.1} parent=31 // pred_check
          %p500 = pneg %p216
        $region54: #{tpu_custom_call.1} parent=31 // pred_check_branch
          %502 = sbr.rel (%p500) target = $region56
        $region55: #{tpu_custom_call.1} parent=31 // pred_region
          %p503 = scmp.lt.s32.totalorder %s24, 1
          %s504 = scalar_select %p503, %s24, 1
          %s505 = scalar_lea.vmem %s7, %s504
        $region56: #{tpu_custom_call.1} parent=31 // pred_fallthru
          _
        // Predicated region
        $region57: #{tpu_custom_call.1} parent=31 // pred_check
          %p506 = pneg %p242
        $region58: #{tpu_custom_call.1} parent=31 // pred_check_branch
          %508 = sbr.rel (%p506) target = $region60
        $region59: #{tpu_custom_call.1} parent=31 // pred_region
          %s509 = sand.u32 %s24, 1
          %s510 = scalar_lea.sflag [#allocation3], %s509
          %s511 = sand.u32 %s232, 1
          %s512 = scalar_lea.vmem [#allocation7], %s511
          %s514 = ssub.s32 16, 16
          %515 = vsyncadd %s510, %s514
          %s516 = smul.addr %s24, 16
          %s517 = scalar_lea.hbm %s8, %s516
          %s519 = sshll.u32 %s512, 4
          %s520 = int_to_ptr.vmem [resolvable:$true] %s519
          %522 = dma.hbm_to_vmem [thread:$0]  %s517, 16, %s520, %s510
        $region60: #{tpu_custom_call.1} parent=31 // pred_fallthru
          _
        // Predicated region
        $region61: #{tpu_custom_call.1} parent=31 // pred_check
          %p523 = pneg %p268
        $region62: #{tpu_custom_call.1} parent=31 // pred_check_branch
          %525 = sbr.rel (%p523) target = $region64
        $region63: #{tpu_custom_call.1} parent=31 // pred_region
          %p526 = scmp.lt.s32.totalorder %s24, 1
          %s527 = scalar_select %p526, %s24, 1
          %s528 = smul.addr %s527, 4
          %s529 = smul.addr %s528, 4
          %s530 = scalar_lea.vmem %s9, %s529
        $region64: #{tpu_custom_call.1} parent=31 // pred_fallthru
          _
        // Predicated region
        $region65: #{tpu_custom_call.1} parent=31 // pred_check
          %p531 = pneg %p294
        $region66: #{tpu_custom_call.1} parent=31 // pred_check_branch
          %533 = sbr.rel (%p531) target = $region68
        $region67: #{tpu_custom_call.1} parent=31 // pred_region
          %s534 = sand.u32 %s24, 1
          %s535 = scalar_lea.sflag [#allocation3], %s534
          %s536 = sand.u32 %s284, 1
          %s537 = scalar_lea.vmem [#allocation8], %s536
          %s539 = ssub.s32 16, 16
          %540 = vsyncadd %s535, %s539
          %s541 = smul.addr %s24, 16
          %s542 = scalar_lea.hbm %s10, %s541
          %s544 = sshll.u32 %s537, 4
          %s545 = int_to_ptr.vmem [resolvable:$true] %s544
          %547 = dma.hbm_to_vmem [thread:$0]  %s542, 16, %s545, %s535
        $region68: #{tpu_custom_call.1} parent=31 // pred_fallthru
          _
        // Predicated region
        $region69: #{tpu_custom_call.1} parent=31 // pred_check
          %p548 = pneg %p320
        $region70: #{tpu_custom_call.1} parent=31 // pred_check_branch
          %550 = sbr.rel (%p548) target = $region72
        $region71: #{tpu_custom_call.1} parent=31 // pred_region
          %p551 = scmp.lt.s32.totalorder %s24, 1
          %s552 = scalar_select %p551, %s24, 1
          %s553 = smul.addr %s552, 8
          %s554 = smul.addr %s553, 4
          %s555 = scalar_lea.vmem %s11, %s554
        $region72: #{tpu_custom_call.1} parent=31 // pred_fallthru
          _
        // Predicated region
        $region73: #{tpu_custom_call.1} parent=31 // pred_check
          %p556 = pneg %p346
        $region74: #{tpu_custom_call.1} parent=31 // pred_check_branch
          %558 = sbr.rel (%p556) target = $region76
        $region75: #{tpu_custom_call.1} parent=31 // pred_region
          %p559 = scmp.lt.s32.totalorder %s24, 1
          %s560 = scalar_select %p559, %s24, 1
          %s561 = scalar_lea.vmem %s12, %s560
        $region76: #{tpu_custom_call.1} parent=31 // pred_fallthru
          _
      $region32: #{tpu_custom_call.1} parent=5 // pred_fallthru
        _
      %p562 = scmp.le.s32.totalorder 1, %s24
      %p563 = scmp.lt.s32.totalorder %s24, 3
      %p564 = pnand %p562, %p563
      %p565 = pneg %p564
      // Predicated region
      $region77: #{tpu_custom_call.1} parent=5 // pred_check
        _
      $region78: #{tpu_custom_call.1} parent=5 // pred_check_branch
        %567 = sbr.rel (%p564) target = $region80
      $region79: #{tpu_custom_call.1} parent=5 // pred_region
        %s568 = ssub.s32 %s24, 1
        // Predicated region
        $region81: #{tpu_custom_call.1} parent=79 // pred_check
          %p569 = pneg %p45
        $region82: #{tpu_custom_call.1} parent=79 // pred_check_branch
          %571 = sbr.rel (%p569) target = $region84
        $region83: #{tpu_custom_call.1} parent=79 // pred_region
          %572 = dma.done [#allocation3], 256
        $region84: #{tpu_custom_call.1} parent=79 // pred_fallthru
          _
        // Predicated region
        $region85: #{tpu_custom_call.1} parent=79 // pred_check
          %p573 = pneg %p66
        $region86: #{tpu_custom_call.1} parent=79 // pred_check_branch
          %575 = sbr.rel (%p573) target = $region88
        $region87: #{tpu_custom_call.1} parent=79 // pred_region
          %576 = dma.done [#allocation6], 256
        $region88: #{tpu_custom_call.1} parent=79 // pred_fallthru
          _
        %s577 = sand.u32 %s29, 1
        %s578 = scalar_lea.sflag [#allocation3], %s577
        %s579 = sand.u32 %s235, 1
        %s580 = scalar_lea.vmem [#allocation7], %s579
        // Predicated region
        $region89: #{tpu_custom_call.1} parent=79 // pred_check
          %p581 = pneg %p248
        $region90: #{tpu_custom_call.1} parent=79 // pred_check_branch
          %583 = sbr.rel (%p581) target = $region92
        $region91: #{tpu_custom_call.1} parent=79 // pred_region
          %584 = dma.done %s578, 16
        $region92: #{tpu_custom_call.1} parent=79 // pred_fallthru
          _
        %s585 = sand.u32 %s29, 1
        %s586 = scalar_lea.sflag [#allocation3], %s585
        %s587 = sand.u32 %s287, 1
        %s588 = scalar_lea.vmem [#allocation8], %s587
        // Predicated region
        $region93: #{tpu_custom_call.1} parent=79 // pred_check
          %p589 = pneg %p300
        $region94: #{tpu_custom_call.1} parent=79 // pred_check_branch
          %591 = sbr.rel (%p589) target = $region96
        $region95: #{tpu_custom_call.1} parent=79 // pred_region
          %592 = dma.done %s586, 16
        $region96: #{tpu_custom_call.1} parent=79 // pred_fallthru
          _
        %p593 = pneg %p45
        %p594 = pneg %p42
        %p595 = pneg %p66
        %p596 = pneg %p63
        %p597 = scmp.lt.s32.totalorder %s29, 1
        %s598 = scalar_select %p597, %s29, 1
        %s599 = scalar_lea.vmem %s2, %s598
        %p600 = pneg %p92
        %p601 = pneg %p89
        %p602 = scmp.lt.s32.totalorder %s29, 1
        %s603 = scalar_select %p602, %s29, 1
        %s604 = scalar_lea.vmem %s3, %s603
        %p605 = pneg %p118
        %p606 = pneg %p115
        %p607 = scmp.lt.s32.totalorder %s29, 1
        %s608 = scalar_select %p607, %s29, 1
        %s609 = smul.addr %s608, 4
        %s610 = smul.addr %s609, 4
        %s611 = scalar_lea.vmem %s4, %s610
        %p612 = pneg %p144
        %p613 = pneg %p141
        %p614 = scmp.lt.s32.totalorder %s29, 1
        %s615 = scalar_select %p614, %s29, 1
        %s616 = smul.addr %s615, 4
        %s617 = smul.addr %s616, 4
        %s618 = scalar_lea.vmem %s5, %s617
        %p619 = pneg %p170
        %p620 = pneg %p167
        %p621 = scmp.lt.s32.totalorder %s29, 1
        %s622 = scalar_select %p621, %s29, 1
        %s623 = scalar_lea.vmem %s6, %s622
        %p624 = pneg %p196
        %p625 = pneg %p193
        %p626 = scmp.lt.s32.totalorder %s29, 1
        %s627 = scalar_select %p626, %s29, 1
        %s628 = scalar_lea.vmem %s7, %s627
        %p629 = pneg %p222
        %p630 = pneg %p219
        %s631 = sand.u32 %s29, 1
        %s632 = scalar_lea.sflag [#allocation3], %s631
        %s633 = sand.u32 %s235, 1
        %s634 = scalar_lea.vmem [#allocation7], %s633
        %p635 = pneg %p248
        %p636 = pneg %p245
        %p637 = scmp.lt.s32.totalorder %s29, 1
        %s638 = scalar_select %p637, %s29, 1
        %s639 = smul.addr %s638, 4
        %s640 = smul.addr %s639, 4
        %s641 = scalar_lea.vmem %s9, %s640
        %p642 = pneg %p274
        %p643 = pneg %p271
        %s644 = sand.u32 %s29, 1
        %s645 = scalar_lea.sflag [#allocation3], %s644
        %s646 = sand.u32 %s287, 1
        %s647 = scalar_lea.vmem [#allocation8], %s646
        %p648 = pneg %p300
        %p649 = pneg %p297
        %p650 = scmp.lt.s32.totalorder %s29, 1
        %s651 = scalar_select %p650, %s29, 1
        %s652 = smul.addr %s651, 8
        %s653 = smul.addr %s652, 4
        %s654 = scalar_lea.vmem %s11, %s653
        %p655 = pneg %p326
        %p656 = pneg %p323
        %p657 = scmp.lt.s32.totalorder %s29, 1
        %s658 = scalar_select %p657, %s29, 1
        %s659 = scalar_lea.vmem %s12, %s658
        %p660 = pneg %p352
        %p661 = pneg %p349
        %p662 = pneg %p373
        %p663 = pneg %p370
        %p664 = pneg %p394
        %p665 = pneg %p391
        %p666 = pneg %p415
        %p667 = pneg %p412
        %p668 = scmp.lt.s32.totalorder %s29, 1
        %s669 = scalar_select %p668, %s29, 1
        %s670 = scalar_lea.vmem %s2, %s669
        %p671 = scmp.lt.s32.totalorder %s29, 1
        %s672 = scalar_select %p671, %s29, 1
        %s673 = scalar_lea.vmem %s3, %s672
        %p674 = scmp.lt.s32.totalorder %s29, 1
        %s675 = scalar_select %p674, %s29, 1
        %s676 = smul.addr %s675, 4
        %s677 = smul.addr %s676, 4
        %s678 = scalar_lea.vmem %s4, %s677
        %p679 = scmp.lt.s32.totalorder %s29, 1
        %s680 = scalar_select %p679, %s29, 1
        %s681 = smul.addr %s680, 4
        %s682 = smul.addr %s681, 4
        %s683 = scalar_lea.vmem %s5, %s682
        %p684 = scmp.lt.s32.totalorder %s29, 1
        %s685 = scalar_select %p684, %s29, 1
        %s686 = scalar_lea.vmem %s6, %s685
        %p687 = scmp.lt.s32.totalorder %s29, 1
        %s688 = scalar_select %p687, %s29, 1
        %s689 = scalar_lea.vmem %s7, %s688
        %p690 = scmp.lt.s32.totalorder %s29, 1
        %s691 = scalar_select %p690, %s29, 1
        %s692 = smul.addr %s691, 4
        %s693 = smul.addr %s692, 4
        %s694 = scalar_lea.vmem %s9, %s693
        %p695 = scmp.lt.s32.totalorder %s29, 1
        %s696 = scalar_select %p695, %s29, 1
        %s697 = smul.addr %s696, 8
        %s698 = smul.addr %s697, 4
        %s699 = scalar_lea.vmem %s11, %s698
        %p700 = scmp.lt.s32.totalorder %s29, 1
        %s701 = scalar_select %p700, %s29, 1
        %s702 = scalar_lea.vmem %s12, %s701
        %p704 = scmp.eq.s32.totalorder %s29, 0
        // Predicated region
        $region97: #{tpu_custom_call.1} parent=79 // pred_check
          %p705 = pneg %p704
        $region98: #{tpu_custom_call.1} parent=79 // pred_check_branch
          %707 = sbr.rel (%p705) target = $region100
        $region99: #{tpu_custom_call.1} parent=79 // pred_region
          %v708 = vld [vmem:[#allocation5] sm:$0xff]
          %v709 = vld [vmem:[#allocation5 + $0x8] sm:$0xff]
          %vm710 = vcmask 261120
          %711 = vst.msk [vmem:[#allocation9] sm:$0xff] %vm710, %v708
          %712 = vst.msk [vmem:[#allocation9 + $0x8] sm:$0xff] %vm710, %v709
        $region100: #{tpu_custom_call.1} parent=79 // pred_fallthru
          _
        %v713 = vld [vmem:[#allocation9] sm:$0xff]
        %v714 = vld [vmem:[#allocation9 + $0x8] sm:$0xff]
        %v715 = vld [vmem:[%s670] sm:$0x1]
        %v716 = vld [vmem:[%s673] sm:$0x1]
        %vm717 = vcmask 261120
        %v718 = vsel %vm717, %v713, 0.0
        %719 = vadd.xlane.f32.xlu0 %v718
        %v720 = vpop.xlane.xlu0 %719
        %v721 = vsel %vm717, %v714, 0.0
        %722 = vadd.xlane.f32.xlu0 %v721
        %v723 = vpop.xlane.xlu0 %722
        %v724 = vmul.f32 %v713, %v713
        %v725 = vmul.f32 %v714, %v714
        %v726 = vsel %vm717, %v724, 0.0
        %727 = vadd.xlane.f32.xlu0 %v726
        %v728 = vpop.xlane.xlu0 %727
        %v729 = vsel %vm717, %v725, 0.0
        %730 = vadd.xlane.f32.xlu0 %v729
        %v731 = vpop.xlane.xlu0 %730
        %v732 = vmul.f32 %v720, 0.03125
        %v733 = vmul.f32 %v723, 0.03125
        %v734 = vmul.f32 %v728, 0.03125
        %v735 = vmul.f32 %v731, 0.03125
        %v736 = vmul.f32 %v732, %v732
        %v737 = vmul.f32 %v733, %v733
        %v738 = vsub.f32 %v734, %v736
        %v739 = vsub.f32 %v735, %v737
        %v740 = vsub.f32 %v713, %v732
        %v741 = vsub.f32 %v714, %v733
        %v742 = vadd.f32 %v738, 1e-05
        %v743 = vadd.f32 %v739, 1e-05
        %v744 = vrsqrt.pop %v742
        %v745 = vrsqrt.pop %v743
        %v746 = vmul.f32 %v740, %v744
        %v747 = vmul.f32 %v741, %v745
        %v749 = vlaneseq
        %v750 = vshrl.u32 %v749, 7
        %v751 = vsub.s32 0, %v750
        %v752 = vrot.slane %v715, %v751
        %v754 = vmul.f32 %v746, %v752
        %v755 = vmul.f32 %v747, %v752
        %v757 = vlaneseq
        %v758 = vshrl.u32 %v757, 7
        %v759 = vsub.s32 0, %v758
        %v760 = vrot.slane %v716, %v759
        %v762 = vadd.f32 %v754, %v760
        %v763 = vadd.f32 %v755, %v760
        %v764 = vpack.c.bf16 %v763, %v762
        %v765 = vld [vmem:[%s678] sm:$0xf]
        %v766 = vld [vmem:[%s678 + $0x4] sm:$0xf]
        %v767 = vld [vmem:[%s678 + $0x8] sm:$0xf]
        %v768 = vld [vmem:[%s678 + $0xc] sm:$0xf]
        %v773 = vunpack.c.l.b16 %v765
        %v774 = vunpack.c.l.b16 %v766
        %v775 = vunpack.c.l.b16 %v767
        %v776 = vunpack.c.l.b16 %v768
        %v777 = vpack.c.b16 %v774, %v773
        %v778 = vpack.c.b16 %v776, %v775
        %v782 = vsel %vm717, %v764, 0
        %784 = vmatprep.subr.bf16.mxu0 0
        %785 = vmatpush1.bf16.msra.mxu0 %v777
        %786 = vmatprep.subr.bf16.mxu0 0
        %787 = vmatpush1.bf16.msra.mxu0 %v778
        %788 = vmatprep.subr.bf16.mxu0 0
        %789 = vmatpush1.bf16.msra.mxu0 0
        %790 = vmatprep.subr.bf16.mxu0 0
        %791 = vmatpush1.bf16.msra.mxu0 0
        %792 = vmatprep.subr.bf16.mxu0 0
        %793 = vmatpush1.bf16.msra.mxu0 0
        %794 = vmatprep.subr.bf16.mxu0 0
        %795 = vmatpush1.bf16.msra.mxu0 0
        %796 = vmatprep.subr.bf16.mxu0 0
        %797 = vmatpush1.bf16.msra.mxu0 0
        %798 = vmatprep.subr.bf16.mxu0 0
        %799 = vmatpush1.bf16.msra.mxu0 0
        %800 = vmatprep.subr.bf16.mxu0 0
        %801 = vmatpush1.bf16.msra.mxu0 0
        %802 = vmatprep.subr.bf16.mxu0 0
        %803 = vmatpush1.bf16.msra.mxu0 0
        %804 = vmatprep.subr.bf16.mxu0 0
        %805 = vmatpush1.bf16.msra.mxu0 0
        %806 = vmatprep.subr.bf16.mxu0 0
        %807 = vmatpush1.bf16.msra.mxu0 0
        %808 = vmatprep.subr.bf16.mxu0 0
        %809 = vmatpush1.bf16.msra.mxu0 0
        %810 = vmatprep.subr.bf16.mxu0 0
        %811 = vmatpush1.bf16.msra.mxu0 0
        %812 = vmatprep.subr.bf16.mxu0 0
        %813 = vmatpush1.bf16.msra.mxu0 0
        %814 = vmatprep.subr.bf16.mxu0 0
        %815 = vmatpush1.bf16.msra.mxu0 0
        %816 = vmatprep.mubr.bf16.mxu0 0
        %817 = vmatmul.mubr.bf16.gmra.mrb[0].mxu0 %v782
        %v818 = vpop.f32.mrb[0].mxu0
        %v819 = vadd.f32 0.0, %v818
        %v820 = vpop.f32.mrb[0].mxu0
        %v821 = vpop.f32.mrb[0].mxu0
        %v822 = vadd.f32 0.0, %v821
        %v823 = vpop.f32.mrb[0].mxu0
        %824 = vdwg.mxu0
        %v825 = vld [vmem:[#allocation2] sm:$0xff]
        %v826 = vld [vmem:[#allocation2 + $0x8] sm:$0xff]
        %v827 = vpack.c.bf16 %v822, %v819
        %829 = vrot.lane.b32.xlu0 %v827, 96
        %v830 = vpop.permute.xlu0 %829
        %vm831 = vcmask 64512
        %v833 = vsel %vm831, %v827, 0
        %v836 = vsel %vm831, %v830, 0
        %838 = vmatprep.subr.bf16.mxu0 0
        %839 = vmatpush1.bf16.xpose.msra.mxu0 %v836
        %840 = vmatprep.subr.bf16.mxu0 0
        %841 = vmatpush1.bf16.xpose.msra.mxu0 0
        %842 = vmatprep.subr.bf16.mxu0 0
        %843 = vmatpush1.bf16.xpose.msra.mxu0 0
        %844 = vmatprep.subr.bf16.mxu0 0
        %845 = vmatpush1.bf16.xpose.msra.mxu0 0
        %846 = vmatprep.subr.bf16.mxu0 0
        %847 = vmatpush1.bf16.xpose.msra.mxu0 0
        %848 = vmatprep.subr.bf16.mxu0 0
        %849 = vmatpush1.bf16.xpose.msra.mxu0 0
        %850 = vmatprep.subr.bf16.mxu0 0
        %851 = vmatpush1.bf16.xpose.msra.mxu0 0
        %852 = vmatprep.subr.bf16.mxu0 0
        %853 = vmatpush1.bf16.xpose.msra.mxu0 0
        %854 = vmatprep.subr.bf16.mxu0 0
        %855 = vmatpush1.bf16.xpose.msra.mxu0 0
        %856 = vmatprep.subr.bf16.mxu0 0
        %857 = vmatpush1.bf16.xpose.msra.mxu0 0
        %858 = vmatprep.subr.bf16.mxu0 0
        %859 = vmatpush1.bf16.xpose.msra.mxu0 0
        %860 = vmatprep.subr.bf16.mxu0 0
        %861 = vmatpush1.bf16.xpose.msra.mxu0 0
        %862 = vmatprep.subr.bf16.mxu0 0
        %863 = vmatpush1.bf16.xpose.msra.mxu0 0
        %864 = vmatprep.subr.bf16.mxu0 0
        %865 = vmatpush1.bf16.xpose.msra.mxu0 0
        %866 = vmatprep.subr.bf16.mxu0 0
        %867 = vmatpush1.bf16.xpose.msra.mxu0 0
        %868 = vmatprep.subr.bf16.mxu0 0
        %869 = vmatpush1.bf16.xpose.msra.mxu0 0
        %870 = vmatprep.mubr.bf16.mxu0 0
        %871 = vmatmul.mubr.bf16.gmra.mrb[0].mxu0 %v833
        %v872 = vpop.f32.mrb[0].mxu0
        %v873 = vadd.f32 %v825, %v872
        %v874 = vpop.f32.mrb[0].mxu0
        %v875 = vpop.f32.mrb[0].mxu0
        %v876 = vadd.f32 %v826, %v875
        %v877 = vpop.f32.mrb[0].mxu0
        %878 = vdwg.mxu0
        %vm879 = vcmask 130048
        %v880 = vsel %vm879, %v873, -inf
        %881 = vmax.xlane.f32.xlu0 %v880
        %v882 = vpop.xlane.xlu0 %881
        %v883 = vsel %vm879, %v876, -inf
        %884 = vmax.xlane.f32.xlu0 %v883
        %v885 = vpop.xlane.xlu0 %884
        %v886 = vsub.f32 %v873, %v882
        %v887 = vsub.f32 %v876, %v885
        %v888 = vmul.f32 %v886, 1.442695
        %v889 = vpow.pop %v888
        %v890 = vmul.f32 %v887, 1.442695
        %v891 = vpow.pop %v890
        %v892 = vsel %vm879, %v889, 0.0
        %893 = vadd.xlane.f32.xlu0 %v892
        %v894 = vpop.xlane.xlu0 %893
        %v895 = vsel %vm879, %v891, 0.0
        %896 = vadd.xlane.f32.xlu0 %v895
        %v897 = vpop.xlane.xlu0 %896
        %v898 = vrcp.pop %v894
        %v899 = vrcp.pop %v897
        %v900 = vmul.f32 %v889, %v898
        %v901 = vmul.f32 %v891, %v899
        %v902 = vpack.c.bf16 %v901, %v900
        %903 = vrot.lane.b32.xlu0 %v827, 64
        %v904 = vpop.permute.xlu0 %903
        %v907 = vsel %vm879, %v902, 0
        %909 = vmatprep.subr.bf16.mxu0 0
        %910 = vmatpush1.bf16.msra.mxu0 %v904
        %911 = vmatprep.subr.bf16.mxu0 0
        %912 = vmatpush1.bf16.msra.mxu0 0
        %913 = vmatprep.subr.bf16.mxu0 0
        %914 = vmatpush1.bf16.msra.mxu0 0
        %915 = vmatprep.subr.bf16.mxu0 0
        %916 = vmatpush1.bf16.msra.mxu0 0
        %917 = vmatprep.subr.bf16.mxu0 0
        %918 = vmatpush1.bf16.msra.mxu0 0
        %919 = vmatprep.subr.bf16.mxu0 0
        %920 = vmatpush1.bf16.msra.mxu0 0
        %921 = vmatprep.subr.bf16.mxu0 0
        %922 = vmatpush1.bf16.msra.mxu0 0
        %923 = vmatprep.subr.bf16.mxu0 0
        %924 = vmatpush1.bf16.msra.mxu0 0
        %925 = vmatprep.subr.bf16.mxu0 0
        %926 = vmatpush1.bf16.msra.mxu0 0
        %927 = vmatprep.subr.bf16.mxu0 0
        %928 = vmatpush1.bf16.msra.mxu0 0
        %929 = vmatprep.subr.bf16.mxu0 0
        %930 = vmatpush1.bf16.msra.mxu0 0
        %931 = vmatprep.subr.bf16.mxu0 0
        %932 = vmatpush1.bf16.msra.mxu0 0
        %933 = vmatprep.subr.bf16.mxu0 0
        %934 = vmatpush1.bf16.msra.mxu0 0
        %935 = vmatprep.subr.bf16.mxu0 0
        %936 = vmatpush1.bf16.msra.mxu0 0
        %937 = vmatprep.subr.bf16.mxu0 0
        %938 = vmatpush1.bf16.msra.mxu0 0
        %939 = vmatprep.subr.bf16.mxu0 0
        %940 = vmatpush1.bf16.msra.mxu0 0
        %941 = vmatprep.mubr.bf16.mxu0 0
        %942 = vmatmul.mubr.bf16.gmra.mrb[0].mxu0 %v907
        %v943 = vpop.f32.mrb[0].mxu0
        %v944 = vadd.f32 0.0, %v943
        %v945 = vpop.f32.mrb[0].mxu0
        %v946 = vpop.f32.mrb[0].mxu0
        %v947 = vadd.f32 0.0, %v946
        %v948 = vpop.f32.mrb[0].mxu0
        %949 = vdwg.mxu0
        %950 = vrot.lane.b32.xlu0 %v827, 120
        %v951 = vpop.permute.xlu0 %950
        %952 = vrot.lane.b32.xlu0 %v827, 88
        %v953 = vpop.permute.xlu0 %952
        %v955 = vsel %vm831, %v951, 0
        %v958 = vsel %vm831, %v953, 0
        %960 = vmatprep.subr.bf16.mxu0 0
        %961 = vmatpush1.bf16.xpose.msra.mxu0 %v958
        %962 = vmatprep.subr.bf16.mxu0 0
        %963 = vmatpush1.bf16.xpose.msra.mxu0 0
        %964 = vmatprep.subr.bf16.mxu0 0
        %965 = vmatpush1.bf16.xpose.msra.mxu0 0
        %966 = vmatprep.subr.bf16.mxu0 0
        %967 = vmatpush1.bf16.xpose.msra.mxu0 0
        %968 = vmatprep.subr.bf16.mxu0 0
        %969 = vmatpush1.bf16.xpose.msra.mxu0 0
        %970 = vmatprep.subr.bf16.mxu0 0
        %971 = vmatpush1.bf16.xpose.msra.mxu0 0
        %972 = vmatprep.subr.bf16.mxu0 0
        %973 = vmatpush1.bf16.xpose.msra.mxu0 0
        %974 = vmatprep.subr.bf16.mxu0 0
        %975 = vmatpush1.bf16.xpose.msra.mxu0 0
        %976 = vmatprep.subr.bf16.mxu0 0
        %977 = vmatpush1.bf16.xpose.msra.mxu0 0
        %978 = vmatprep.subr.bf16.mxu0 0
        %979 = vmatpush1.bf16.xpose.msra.mxu0 0
        %980 = vmatprep.subr.bf16.mxu0 0
        %981 = vmatpush1.bf16.xpose.msra.mxu0 0
        %982 = vmatprep.subr.bf16.mxu0 0
        %983 = vmatpush1.bf16.xpose.msra.mxu0 0
        %984 = vmatprep.subr.bf16.mxu0 0
        %985 = vmatpush1.bf16.xpose.msra.mxu0 0
        %986 = vmatprep.subr.bf16.mxu0 0
        %987 = vmatpush1.bf16.xpose.msra.mxu0 0
        %988 = vmatprep.subr.bf16.mxu0 0
        %989 = vmatpush1.bf16.xpose.msra.mxu0 0
        %990 = vmatprep.subr.bf16.mxu0 0
        %991 = vmatpush1.bf16.xpose.msra.mxu0 0
        %992 = vmatprep.mubr.bf16.mxu0 0
        %993 = vmatmul.mubr.bf16.gmra.mrb[0].mxu0 %v955
        %v994 = vpop.f32.mrb[0].mxu0
        %v995 = vadd.f32 %v825, %v994
        %v996 = vpop.f32.mrb[0].mxu0
        %v997 = vpop.f32.mrb[0].mxu0
        %v998 = vadd.f32 %v826, %v997
        %v999 = vpop.f32.mrb[0].mxu0
        %1000 = vdwg.mxu0
        %v1001 = vsel %vm879, %v995, -inf
        %1002 = vmax.xlane.f32.xlu0 %v1001
        %v1003 = vpop.xlane.xlu0 %1002
        %v1004 = vsel %vm879, %v998, -inf
        %1005 = vmax.xlane.f32.xlu0 %v1004
        %v1006 = vpop.xlane.xlu0 %1005
        %v1007 = vsub.f32 %v995, %v1003
        %v1008 = vsub.f32 %v998, %v1006
        %v1009 = vmul.f32 %v1007, 1.442695
        %v1010 = vpow.pop %v1009
        %v1011 = vmul.f32 %v1008, 1.442695
        %v1012 = vpow.pop %v1011
        %v1013 = vsel %vm879, %v1010, 0.0
        %1014 = vadd.xlane.f32.xlu0 %v1013
        %v1015 = vpop.xlane.xlu0 %1014
        %v1016 = vsel %vm879, %v1012, 0.0
        %1017 = vadd.xlane.f32.xlu0 %v1016
        %v1018 = vpop.xlane.xlu0 %1017
        %v1019 = vrcp.pop %v1015
        %v1020 = vrcp.pop %v1018
        %v1021 = vmul.f32 %v1010, %v1019
        %v1022 = vmul.f32 %v1012, %v1020
        %v1023 = vpack.c.bf16 %v1022, %v1021
        %1024 = vrot.lane.b32.xlu0 %v827, 56
        %v1025 = vpop.permute.xlu0 %1024
        %v1028 = vsel %vm879, %v1023, 0
        %1030 = vmatprep.subr.bf16.mxu0 0
        %1031 = vmatpush1.bf16.msra.mxu0 %v1025
        %1032 = vmatprep.subr.bf16.mxu0 0
        %1033 = vmatpush1.bf16.msra.mxu0 0
        %1034 = vmatprep.subr.bf16.mxu0 0
        %1035 = vmatpush1.bf16.msra.mxu0 0
        %1036 = vmatprep.subr.bf16.mxu0 0
        %1037 = vmatpush1.bf16.msra.mxu0 0
        %1038 = vmatprep.subr.bf16.mxu0 0
        %1039 = vmatpush1.bf16.msra.mxu0 0
        %1040 = vmatprep.subr.bf16.mxu0 0
        %1041 = vmatpush1.bf16.msra.mxu0 0
        %1042 = vmatprep.subr.bf16.mxu0 0
        %1043 = vmatpush1.bf16.msra.mxu0 0
        %1044 = vmatprep.subr.bf16.mxu0 0
        %1045 = vmatpush1.bf16.msra.mxu0 0
        %1046 = vmatprep.subr.bf16.mxu0 0
        %1047 = vmatpush1.bf16.msra.mxu0 0
        %1048 = vmatprep.subr.bf16.mxu0 0
        %1049 = vmatpush1.bf16.msra.mxu0 0
        %1050 = vmatprep.subr.bf16.mxu0 0
        %1051 = vmatpush1.bf16.msra.mxu0 0
        %1052 = vmatprep.subr.bf16.mxu0 0
        %1053 = vmatpush1.bf16.msra.mxu0 0
        %1054 = vmatprep.subr.bf16.mxu0 0
        %1055 = vmatpush1.bf16.msra.mxu0 0
        %1056 = vmatprep.subr.bf16.mxu0 0
        %1057 = vmatpush1.bf16.msra.mxu0 0
        %1058 = vmatprep.subr.bf16.mxu0 0
        %1059 = vmatpush1.bf16.msra.mxu0 0
        %1060 = vmatprep.subr.bf16.mxu0 0
        %1061 = vmatpush1.bf16.msra.mxu0 0
        %1062 = vmatprep.mubr.bf16.mxu0 0
        %1063 = vmatmul.mubr.bf16.gmra.mrb[0].mxu0 %v1028
        %v1064 = vpop.f32.mrb[0].mxu0
        %v1065 = vadd.f32 0.0, %v1064
        %v1066 = vpop.f32.mrb[0].mxu0
        %v1067 = vpop.f32.mrb[0].mxu0
        %v1068 = vadd.f32 0.0, %v1067
        %v1069 = vpop.f32.mrb[0].mxu0
        %1070 = vdwg.mxu0
        %1071 = vrot.lane.b32.xlu0 %v827, 112
        %v1072 = vpop.permute.xlu0 %1071
        %1073 = vrot.lane.b32.xlu0 %v827, 80
        %v1074 = vpop.permute.xlu0 %1073
        %v1076 = vsel %vm831, %v1072, 0
        %v1079 = vsel %vm831, %v1074, 0
        %1081 = vmatprep.subr.bf16.mxu0 0
        %1082 = vmatpush1.bf16.xpose.msra.mxu0 %v1079
        %1083 = vmatprep.subr.bf16.mxu0 0
        %1084 = vmatpush1.bf16.xpose.msra.mxu0 0
        %1085 = vmatprep.subr.bf16.mxu0 0
        %1086 = vmatpush1.bf16.xpose.msra.mxu0 0
        %1087 = vmatprep.subr.bf16.mxu0 0
        %1088 = vmatpush1.bf16.xpose.msra.mxu0 0
        %1089 = vmatprep.subr.bf16.mxu0 0
        %1090 = vmatpush1.bf16.xpose.msra.mxu0 0
        %1091 = vmatprep.subr.bf16.mxu0 0
        %1092 = vmatpush1.bf16.xpose.msra.mxu0 0
        %1093 = vmatprep.subr.bf16.mxu0 0
        %1094 = vmatpush1.bf16.xpose.msra.mxu0 0
        %1095 = vmatprep.subr.bf16.mxu0 0
        %1096 = vmatpush1.bf16.xpose.msra.mxu0 0
        %1097 = vmatprep.subr.bf16.mxu0 0
        %1098 = vmatpush1.bf16.xpose.msra.mxu0 0
        %1099 = vmatprep.subr.bf16.mxu0 0
        %1100 = vmatpush1.bf16.xpose.msra.mxu0 0
        %1101 = vmatprep.subr.bf16.mxu0 0
        %1102 = vmatpush1.bf16.xpose.msra.mxu0 0
        %1103 = vmatprep.subr.bf16.mxu0 0
        %1104 = vmatpush1.bf16.xpose.msra.mxu0 0
        %1105 = vmatprep.subr.bf16.mxu0 0
        %1106 = vmatpush1.bf16.xpose.msra.mxu0 0
        %1107 = vmatprep.subr.bf16.mxu0 0
        %1108 = vmatpush1.bf16.xpose.msra.mxu0 0
        %1109 = vmatprep.subr.bf16.mxu0 0
        %1110 = vmatpush1.bf16.xpose.msra.mxu0 0
        %1111 = vmatprep.subr.bf16.mxu0 0
        %1112 = vmatpush1.bf16.xpose.msra.mxu0 0
        %1113 = vmatprep.mubr.bf16.mxu0 0
        %1114 = vmatmul.mubr.bf16.gmra.mrb[0].mxu0 %v1076
        %v1115 = vpop.f32.mrb[0].mxu0
        %v1116 = vadd.f32 %v825, %v1115
        %v1117 = vpop.f32.mrb[0].mxu0
        %v1118 = vpop.f32.mrb[0].mxu0
        %v1119 = vadd.f32 %v826, %v1118
        %v1120 = vpop.f32.mrb[0].mxu0
        %1121 = vdwg.mxu0
        %v1122 = vsel %vm879, %v1116, -inf
        %1123 = vmax.xlane.f32.xlu0 %v1122
        %v1124 = vpop.xlane.xlu0 %1123
        %v1125 = vsel %vm879, %v1119, -inf
        %1126 = vmax.xlane.f32.xlu0 %v1125
        %v1127 = vpop.xlane.xlu0 %1126
        %v1128 = vsub.f32 %v1116, %v1124
        %v1129 = vsub.f32 %v1119, %v1127
        %v1130 = vmul.f32 %v1128, 1.442695
        %v1131 = vpow.pop %v1130
        %v1132 = vmul.f32 %v1129, 1.442695
        %v1133 = vpow.pop %v1132
        %v1134 = vsel %vm879, %v1131, 0.0
        %1135 = vadd.xlane.f32.xlu0 %v1134
        %v1136 = vpop.xlane.xlu0 %1135
        %v1137 = vsel %vm879, %v1133, 0.0
        %1138 = vadd.xlane.f32.xlu0 %v1137
        %v1139 = vpop.xlane.xlu0 %1138
        %v1140 = vrcp.pop %v1136
        %v1141 = vrcp.pop %v1139
        %v1142 = vmul.f32 %v1131, %v1140
        %v1143 = vmul.f32 %v1133, %v1141
        %v1144 = vpack.c.bf16 %v1143, %v1142
        %1145 = vrot.lane.b32.xlu0 %v827, 48
        %v1146 = vpop.permute.xlu0 %1145
        %v1149 = vsel %vm879, %v1144, 0
        %1151 = vmatprep.subr.bf16.mxu0 0
        %1152 = vmatpush1.bf16.msra.mxu0 %v1146
        %1153 = vmatprep.subr.bf16.mxu0 0
        %1154 = vmatpush1.bf16.msra.mxu0 0
        %1155 = vmatprep.subr.bf16.mxu0 0
        %1156 = vmatpush1.bf16.msra.mxu0 0
        %1157 = vmatprep.subr.bf16.mxu0 0
        %1158 = vmatpush1.bf16.msra.mxu0 0
        %1159 = vmatprep.subr.bf16.mxu0 0
        %1160 = vmatpush1.bf16.msra.mxu0 0
        %1161 = vmatprep.subr.bf16.mxu0 0
        %1162 = vmatpush1.bf16.msra.mxu0 0
        %1163 = vmatprep.subr.bf16.mxu0 0
        %1164 = vmatpush1.bf16.msra.mxu0 0
        %1165 = vmatprep.subr.bf16.mxu0 0
        %1166 = vmatpush1.bf16.msra.mxu0 0
        %1167 = vmatprep.subr.bf16.mxu0 0
        %1168 = vmatpush1.bf16.msra.mxu0 0
        %1169 = vmatprep.subr.bf16.mxu0 0
        %1170 = vmatpush1.bf16.msra.mxu0 0
        %1171 = vmatprep.subr.bf16.mxu0 0
        %1172 = vmatpush1.bf16.msra.mxu0 0
        %1173 = vmatprep.subr.bf16.mxu0 0
        %1174 = vmatpush1.bf16.msra.mxu0 0
        %1175 = vmatprep.subr.bf16.mxu0 0
        %1176 = vmatpush1.bf16.msra.mxu0 0
        %1177 = vmatprep.subr.bf16.mxu0 0
        %1178 = vmatpush1.bf16.msra.mxu0 0
        %1179 = vmatprep.subr.bf16.mxu0 0
        %1180 = vmatpush1.bf16.msra.mxu0 0
        %1181 = vmatprep.subr.bf16.mxu0 0
        %1182 = vmatpush1.bf16.msra.mxu0 0
        %1183 = vmatprep.mubr.bf16.mxu0 0
        %1184 = vmatmul.mubr.bf16.gmra.mrb[0].mxu0 %v1149
        %v1185 = vpop.f32.mrb[0].mxu0
        %v1186 = vadd.f32 0.0, %v1185
        %v1187 = vpop.f32.mrb[0].mxu0
        %v1188 = vpop.f32.mrb[0].mxu0
        %v1189 = vadd.f32 0.0, %v1188
        %v1190 = vpop.f32.mrb[0].mxu0
        %1191 = vdwg.mxu0
        %1192 = vrot.lane.b32.xlu0 %v827, 104
        %v1193 = vpop.permute.xlu0 %1192
        %1194 = vrot.lane.b32.xlu0 %v827, 72
        %v1195 = vpop.permute.xlu0 %1194
        %v1197 = vsel %vm831, %v1193, 0
        %v1200 = vsel %vm831, %v1195, 0
        %1202 = vmatprep.subr.bf16.mxu0 0
        %1203 = vmatpush1.bf16.xpose.msra.mxu0 %v1200
        %1204 = vmatprep.subr.bf16.mxu0 0
        %1205 = vmatpush1.bf16.xpose.msra.mxu0 0
        %1206 = vmatprep.subr.bf16.mxu0 0
        %1207 = vmatpush1.bf16.xpose.msra.mxu0 0
        %1208 = vmatprep.subr.bf16.mxu0 0
        %1209 = vmatpush1.bf16.xpose.msra.mxu0 0
        %1210 = vmatprep.subr.bf16.mxu0 0
        %1211 = vmatpush1.bf16.xpose.msra.mxu0 0
        %1212 = vmatprep.subr.bf16.mxu0 0
        %1213 = vmatpush1.bf16.xpose.msra.mxu0 0
        %1214 = vmatprep.subr.bf16.mxu0 0
        %1215 = vmatpush1.bf16.xpose.msra.mxu0 0
        %1216 = vmatprep.subr.bf16.mxu0 0
        %1217 = vmatpush1.bf16.xpose.msra.mxu0 0
        %1218 = vmatprep.subr.bf16.mxu0 0
        %1219 = vmatpush1.bf16.xpose.msra.mxu0 0
        %1220 = vmatprep.subr.bf16.mxu0 0
        %1221 = vmatpush1.bf16.xpose.msra.mxu0 0
        %1222 = vmatprep.subr.bf16.mxu0 0
        %1223 = vmatpush1.bf16.xpose.msra.mxu0 0
        %1224 = vmatprep.subr.bf16.mxu0 0
        %1225 = vmatpush1.bf16.xpose.msra.mxu0 0
        %1226 = vmatprep.subr.bf16.mxu0 0
        %1227 = vmatpush1.bf16.xpose.msra.mxu0 0
        %1228 = vmatprep.subr.bf16.mxu0 0
        %1229 = vmatpush1.bf16.xpose.msra.mxu0 0
        %1230 = vmatprep.subr.bf16.mxu0 0
        %1231 = vmatpush1.bf16.xpose.msra.mxu0 0
        %1232 = vmatprep.subr.bf16.mxu0 0
        %1233 = vmatpush1.bf16.xpose.msra.mxu0 0
        %1234 = vmatprep.mubr.bf16.mxu0 0
        %1235 = vmatmul.mubr.bf16.gmra.mrb[0].mxu0 %v1197
        %v1236 = vpop.f32.mrb[0].mxu0
        %v1237 = vadd.f32 %v825, %v1236
        %v1238 = vpop.f32.mrb[0].mxu0
        %v1239 = vpop.f32.mrb[0].mxu0
        %v1240 = vadd.f32 %v826, %v1239
        %v1241 = vpop.f32.mrb[0].mxu0
        %1242 = vdwg.mxu0
        %v1243 = vsel %vm879, %v1237, -inf
        %1244 = vmax.xlane.f32.xlu0 %v1243
        %v1245 = vpop.xlane.xlu0 %1244
        %v1246 = vsel %vm879, %v1240, -inf
        %1247 = vmax.xlane.f32.xlu0 %v1246
        %v1248 = vpop.xlane.xlu0 %1247
        %v1249 = vsub.f32 %v1237, %v1245
        %v1250 = vsub.f32 %v1240, %v1248
        %v1251 = vmul.f32 %v1249, 1.442695
        %v1252 = vpow.pop %v1251
        %v1253 = vmul.f32 %v1250, 1.442695
        %v1254 = vpow.pop %v1253
        %v1255 = vsel %vm879, %v1252, 0.0
        %1256 = vadd.xlane.f32.xlu0 %v1255
        %v1257 = vpop.xlane.xlu0 %1256
        %v1258 = vsel %vm879, %v1254, 0.0
        %1259 = vadd.xlane.f32.xlu0 %v1258
        %v1260 = vpop.xlane.xlu0 %1259
        %v1261 = vrcp.pop %v1257
        %v1262 = vrcp.pop %v1260
        %v1263 = vmul.f32 %v1252, %v1261
        %v1264 = vmul.f32 %v1254, %v1262
        %v1265 = vpack.c.bf16 %v1264, %v1263
        %1266 = vrot.lane.b32.xlu0 %v827, 40
        %v1267 = vpop.permute.xlu0 %1266
        %v1270 = vsel %vm879, %v1265, 0
        %1272 = vmatprep.subr.bf16.mxu0 0
        %1273 = vmatpush1.bf16.msra.mxu0 %v1267
        %1274 = vmatprep.subr.bf16.mxu0 0
        %1275 = vmatpush1.bf16.msra.mxu0 0
        %1276 = vmatprep.subr.bf16.mxu0 0
        %1277 = vmatpush1.bf16.msra.mxu0 0
        %1278 = vmatprep.subr.bf16.mxu0 0
        %1279 = vmatpush1.bf16.msra.mxu0 0
        %1280 = vmatprep.subr.bf16.mxu0 0
        %1281 = vmatpush1.bf16.msra.mxu0 0
        %1282 = vmatprep.subr.bf16.mxu0 0
        %1283 = vmatpush1.bf16.msra.mxu0 0
        %1284 = vmatprep.subr.bf16.mxu0 0
        %1285 = vmatpush1.bf16.msra.mxu0 0
        %1286 = vmatprep.subr.bf16.mxu0 0
        %1287 = vmatpush1.bf16.msra.mxu0 0
        %1288 = vmatprep.subr.bf16.mxu0 0
        %1289 = vmatpush1.bf16.msra.mxu0 0
        %1290 = vmatprep.subr.bf16.mxu0 0
        %1291 = vmatpush1.bf16.msra.mxu0 0
        %1292 = vmatprep.subr.bf16.mxu0 0
        %1293 = vmatpush1.bf16.msra.mxu0 0
        %1294 = vmatprep.subr.bf16.mxu0 0
        %1295 = vmatpush1.bf16.msra.mxu0 0
        %1296 = vmatprep.subr.bf16.mxu0 0
        %1297 = vmatpush1.bf16.msra.mxu0 0
        %1298 = vmatprep.subr.bf16.mxu0 0
        %1299 = vmatpush1.bf16.msra.mxu0 0
        %1300 = vmatprep.subr.bf16.mxu0 0
        %1301 = vmatpush1.bf16.msra.mxu0 0
        %1302 = vmatprep.subr.bf16.mxu0 0
        %1303 = vmatpush1.bf16.msra.mxu0 0
        %1304 = vmatprep.mubr.bf16.mxu0 0
        %1305 = vmatmul.mubr.bf16.gmra.mrb[0].mxu0 %v1270
        %v1306 = vpop.f32.mrb[0].mxu0
        %v1307 = vadd.f32 0.0, %v1306
        %v1308 = vpop.f32.mrb[0].mxu0
        %v1309 = vpop.f32.mrb[0].mxu0
        %v1310 = vadd.f32 0.0, %v1309
        %v1311 = vpop.f32.mrb[0].mxu0
        %1312 = vdwg.mxu0
        %1315 = vrot.lane.b32.xlu0 %v1065, 8
        %v1316 = vpop.permute.xlu0 %1315
        %1317 = vrot.lane.b32.xlu0 %v1068, 8
        %v1318 = vpop.permute.xlu0 %1317
        %1323 = vrot.lane.b32.xlu0 %v1186, 16
        %v1324 = vpop.permute.xlu0 %1323
        %1325 = vrot.lane.b32.xlu0 %v1189, 16
        %v1326 = vpop.permute.xlu0 %1325
        %1331 = vrot.lane.b32.xlu0 %v1307, 24
        %v1332 = vpop.permute.xlu0 %1331
        %1333 = vrot.lane.b32.xlu0 %v1310, 24
        %v1334 = vpop.permute.xlu0 %1333
        %v1337 = vsel %vm831, %v944, %v1316
        %v1338 = vsel %vm831, %v947, %v1318
        %v1339 = vsel %vm879, %v1337, %v1324
        %v1340 = vsel %vm879, %v1338, %v1326
        %vm1341 = vcmask 195584
        %v1342 = vsel %vm1341, %v1339, %v1332
        %v1343 = vsel %vm1341, %v1340, %v1334
        %v1344 = vpack.c.bf16 %v1343, %v1342
        %v1345 = vld [vmem:[%s683] sm:$0xf]
        %v1346 = vld [vmem:[%s683 + $0x4] sm:$0xf]
        %v1347 = vld [vmem:[%s683 + $0x8] sm:$0xf]
        %v1348 = vld [vmem:[%s683 + $0xc] sm:$0xf]
        %v1349 = vld [vmem:[%s686] sm:$0x1]
        %v1351 = vlaneseq
        %v1352 = vshrl.u32 %v1351, 7
        %v1353 = vsub.s32 0, %v1352
        %v1354 = vrot.slane %v1349, %v1353
        %v1360 = vunpack.c.l.b16 %v1345
        %v1361 = vunpack.c.l.b16 %v1346
        %v1362 = vunpack.c.l.b16 %v1347
        %v1363 = vunpack.c.l.b16 %v1348
        %v1364 = vpack.c.b16 %v1361, %v1360
        %v1365 = vpack.c.b16 %v1363, %v1362
        %v1369 = vsel %vm717, %v1344, 0
        %1371 = vmatprep.subr.bf16.mxu0 0
        %1372 = vmatpush1.bf16.msra.mxu0 %v1364
        %1373 = vmatprep.subr.bf16.mxu0 0
        %1374 = vmatpush1.bf16.msra.mxu0 %v1365
        %1375 = vmatprep.subr.bf16.mxu0 0
        %1376 = vmatpush1.bf16.msra.mxu0 0
        %1377 = vmatprep.subr.bf16.mxu0 0
        %1378 = vmatpush1.bf16.msra.mxu0 0
        %1379 = vmatprep.subr.bf16.mxu0 0
        %1380 = vmatpush1.bf16.msra.mxu0 0
        %1381 = vmatprep.subr.bf16.mxu0 0
        %1382 = vmatpush1.bf16.msra.mxu0 0
        %1383 = vmatprep.subr.bf16.mxu0 0
        %1384 = vmatpush1.bf16.msra.mxu0 0
        %1385 = vmatprep.subr.bf16.mxu0 0
        %1386 = vmatpush1.bf16.msra.mxu0 0
        %1387 = vmatprep.subr.bf16.mxu0 0
        %1388 = vmatpush1.bf16.msra.mxu0 0
        %1389 = vmatprep.subr.bf16.mxu0 0
        %1390 = vmatpush1.bf16.msra.mxu0 0
        %1391 = vmatprep.subr.bf16.mxu0 0
        %1392 = vmatpush1.bf16.msra.mxu0 0
        %1393 = vmatprep.subr.bf16.mxu0 0
        %1394 = vmatpush1.bf16.msra.mxu0 0
        %1395 = vmatprep.subr.bf16.mxu0 0
        %1396 = vmatpush1.bf16.msra.mxu0 0
        %1397 = vmatprep.subr.bf16.mxu0 0
        %1398 = vmatpush1.bf16.msra.mxu0 0
        %1399 = vmatprep.subr.bf16.mxu0 0
        %1400 = vmatpush1.bf16.msra.mxu0 0
        %1401 = vmatprep.subr.bf16.mxu0 0
        %1402 = vmatpush1.bf16.msra.mxu0 0
        %1403 = vmatprep.mubr.bf16.mxu0 0
        %1404 = vmatmul.mubr.bf16.gmra.mrb[0].mxu0 %v1369
        %v1405 = vpop.f32.mrb[0].mxu0
        %v1406 = vadd.f32 %v1354, %v1405
        %v1407 = vpop.f32.mrb[0].mxu0
        %v1408 = vpop.f32.mrb[0].mxu0
        %v1409 = vadd.f32 %v1354, %v1408
        %v1410 = vpop.f32.mrb[0].mxu0
        %1411 = vdwg.mxu0
        %v1412 = vadd.f32 %v713, %v1406
        %v1413 = vadd.f32 %v714, %v1409
        %v1414 = vld [vmem:[%s689] sm:$0x1]
        %v1415 = vld [vmem:[%s580] sm:$0x1]
        %v1416 = vsel %vm717, %v1412, 0.0
        %1417 = vadd.xlane.f32.xlu0 %v1416
        %v1418 = vpop.xlane.xlu0 %1417
        %v1419 = vsel %vm717, %v1413, 0.0
        %1420 = vadd.xlane.f32.xlu0 %v1419
        %v1421 = vpop.xlane.xlu0 %1420
        %v1422 = vmul.f32 %v1412, %v1412
        %v1423 = vmul.f32 %v1413, %v1413
        %v1424 = vsel %vm717, %v1422, 0.0
        %1425 = vadd.xlane.f32.xlu0 %v1424
        %v1426 = vpop.xlane.xlu0 %1425
        %v1427 = vsel %vm717, %v1423, 0.0
        %1428 = vadd.xlane.f32.xlu0 %v1427
        %v1429 = vpop.xlane.xlu0 %1428
        %v1430 = vmul.f32 %v1418, 0.03125
        %v1431 = vmul.f32 %v1421, 0.03125
        %v1432 = vmul.f32 %v1426, 0.03125
        %v1433 = vmul.f32 %v1429, 0.03125
        %v1434 = vmul.f32 %v1430, %v1430
        %v1435 = vmul.f32 %v1431, %v1431
        %v1436 = vsub.f32 %v1432, %v1434
        %v1437 = vsub.f32 %v1433, %v1435
        %v1438 = vsub.f32 %v1412, %v1430
        %v1439 = vsub.f32 %v1413, %v1431
        %v1440 = vadd.f32 %v1436, 1e-05
        %v1441 = vadd.f32 %v1437, 1e-05
        %v1442 = vrsqrt.pop %v1440
        %v1443 = vrsqrt.pop %v1441
        %v1444 = vmul.f32 %v1438, %v1442
        %v1445 = vmul.f32 %v1439, %v1443
        %v1447 = vlaneseq
        %v1448 = vshrl.u32 %v1447, 7
        %v1449 = vsub.s32 0, %v1448
        %v1450 = vrot.slane %v1414, %v1449
        %v1452 = vmul.f32 %v1444, %v1450
        %v1453 = vmul.f32 %v1445, %v1450
        %v1455 = vlaneseq
        %v1456 = vshrl.u32 %v1455, 7
        %v1457 = vsub.s32 0, %v1456
        %v1458 = vrot.slane %v1415, %v1457
        %v1460 = vadd.f32 %v1452, %v1458
        %v1461 = vadd.f32 %v1453, %v1458
        %v1462 = vpack.c.bf16 %v1461, %v1460
        %v1463 = vld [vmem:[%s694] sm:$0xf]
        %v1464 = vld [vmem:[%s694 + $0x4] sm:$0xf]
        %v1465 = vld [vmem:[%s694 + $0x8] sm:$0xf]
        %v1466 = vld [vmem:[%s694 + $0xc] sm:$0xf]
        %v1467 = vld [vmem:[%s588] sm:$0x1]
        %v1469 = vlaneseq
        %v1470 = vshrl.u32 %v1469, 7
        %v1471 = vsub.s32 0, %v1470
        %v1472 = vrot.slane %v1467, %v1471
        %v1478 = vunpack.c.l.b16 %v1463
        %v1479 = vunpack.c.l.b16 %v1464
        %v1480 = vunpack.c.l.b16 %v1465
        %v1481 = vunpack.c.l.b16 %v1466
        %v1482 = vpack.c.b16 %v1479, %v1478
        %v1483 = vpack.c.b16 %v1481, %v1480
        %v1487 = vsel %vm717, %v1462, 0
        %1489 = vmatprep.subr.bf16.mxu0 0
        %1490 = vmatpush1.bf16.msra.mxu0 %v1482
        %1491 = vmatprep.subr.bf16.mxu0 0
        %1492 = vmatpush1.bf16.msra.mxu0 %v1483
        %1493 = vmatprep.subr.bf16.mxu0 0
        %1494 = vmatpush1.bf16.msra.mxu0 0
        %1495 = vmatprep.subr.bf16.mxu0 0
        %1496 = vmatpush1.bf16.msra.mxu0 0
        %1497 = vmatprep.subr.bf16.mxu0 0
        %1498 = vmatpush1.bf16.msra.mxu0 0
        %1499 = vmatprep.subr.bf16.mxu0 0
        %1500 = vmatpush1.bf16.msra.mxu0 0
        %1501 = vmatprep.subr.bf16.mxu0 0
        %1502 = vmatpush1.bf16.msra.mxu0 0
        %1503 = vmatprep.subr.bf16.mxu0 0
        %1504 = vmatpush1.bf16.msra.mxu0 0
        %1505 = vmatprep.subr.bf16.mxu0 0
        %1506 = vmatpush1.bf16.msra.mxu0 0
        %1507 = vmatprep.subr.bf16.mxu0 0
        %1508 = vmatpush1.bf16.msra.mxu0 0
        %1509 = vmatprep.subr.bf16.mxu0 0
        %1510 = vmatpush1.bf16.msra.mxu0 0
        %1511 = vmatprep.subr.bf16.mxu0 0
        %1512 = vmatpush1.bf16.msra.mxu0 0
        %1513 = vmatprep.subr.bf16.mxu0 0
        %1514 = vmatpush1.bf16.msra.mxu0 0
        %1515 = vmatprep.subr.bf16.mxu0 0
        %1516 = vmatpush1.bf16.msra.mxu0 0
        %1517 = vmatprep.subr.bf16.mxu0 0
        %1518 = vmatpush1.bf16.msra.mxu0 0
        %1519 = vmatprep.subr.bf16.mxu0 0
        %1520 = vmatpush1.bf16.msra.mxu0 0
        %1521 = vmatprep.mubr.bf16.mxu0 0
        %1522 = vmatmul.mubr.bf16.gmra.mrb[0].mxu0 %v1487
        %v1523 = vpop.f32.mrb[0].mxu0
        %v1524 = vadd.f32 %v1472, %v1523
        %v1525 = vpop.f32.mrb[0].mxu0
        %v1526 = vpop.f32.mrb[0].mxu0
        %v1527 = vadd.f32 %v1472, %v1526
        %v1528 = vpop.f32.mrb[0].mxu0
        %1529 = vdwg.mxu0
        %v1530 = vmul.f32 %v1524, %v1524
        %v1531 = vmul.f32 %v1527, %v1527
        %v1532 = vmul.f32 %v1524, %v1530
        %v1533 = vmul.f32 %v1527, %v1531
        %v1534 = vmul.f32 %v1532, 0.044715
        %v1535 = vmul.f32 %v1533, 0.044715
        %v1536 = vadd.f32 %v1524, %v1534
        %v1537 = vadd.f32 %v1527, %v1535
        %v1538 = vmul.f32 %v1536, 0.7978846
        %v1539 = vmul.f32 %v1537, 0.7978846
        %v1540 = vtanh.pop %v1538
        %v1541 = vtanh.pop %v1539
        %v1542 = vadd.f32 %v1540, 1.0
        %v1543 = vadd.f32 %v1541, 1.0
        %v1544 = vmul.f32 %v1542, 0.5
        %v1545 = vmul.f32 %v1543, 0.5
        %v1546 = vmul.f32 %v1524, %v1544
        %v1547 = vmul.f32 %v1527, %v1545
        %v1548 = vpack.c.bf16 %v1547, %v1546
        %v1549 = vld [vmem:[%s699] sm:$0xf]
        %v1550 = vld [vmem:[%s699 + $0x4] sm:$0xf]
        %v1551 = vld [vmem:[%s699 + $0x8] sm:$0xf]
        %v1552 = vld [vmem:[%s699 + $0xc] sm:$0xf]
        %v1553 = vld [vmem:[%s699 + $0x10] sm:$0xf]
        %v1554 = vld [vmem:[%s699 + $0x14] sm:$0xf]
        %v1555 = vld [vmem:[%s699 + $0x18] sm:$0xf]
        %v1556 = vld [vmem:[%s699 + $0x1c] sm:$0xf]
        %v1557 = vld [vmem:[%s702] sm:$0x1]
        %v1559 = vlaneseq
        %v1560 = vshrl.u32 %v1559, 7
        %v1561 = vsub.s32 0, %v1560
        %v1562 = vrot.slane %v1557, %v1561
        %v1572 = vunpack.c.l.b16 %v1549
        %v1573 = vunpack.c.l.b16 %v1550
        %v1574 = vunpack.c.l.b16 %v1551
        %v1575 = vunpack.c.l.b16 %v1552
        %v1576 = vunpack.c.l.b16 %v1553
        %v1577 = vunpack.c.l.b16 %v1554
        %v1578 = vunpack.c.l.b16 %v1555
        %v1579 = vunpack.c.l.b16 %v1556
        %v1580 = vpack.c.b16 %v1573, %v1572
        %v1581 = vpack.c.b16 %v1575, %v1574
        %v1582 = vpack.c.b16 %v1577, %v1576
        %v1583 = vpack.c.b16 %v1579, %v1578
        %vm1588 = vcmask 523264
        %v1590 = vsel %vm1588, %v1548, 0
        %1592 = vmatprep.subr.bf16.mxu0 0
        %1593 = vmatpush1.bf16.msra.mxu0 %v1580
        %1594 = vmatprep.subr.bf16.mxu0 0
        %1595 = vmatpush1.bf16.msra.mxu0 %v1581
        %1596 = vmatprep.subr.bf16.mxu0 0
        %1597 = vmatpush1.bf16.msra.mxu0 %v1582
        %1598 = vmatprep.subr.bf16.mxu0 0
        %1599 = vmatpush1.bf16.msra.mxu0 %v1583
        %1600 = vmatprep.subr.bf16.mxu0 0
        %1601 = vmatpush1.bf16.msra.mxu0 0
        %1602 = vmatprep.subr.bf16.mxu0 0
        %1603 = vmatpush1.bf16.msra.mxu0 0
        %1604 = vmatprep.subr.bf16.mxu0 0
        %1605 = vmatpush1.bf16.msra.mxu0 0
        %1606 = vmatprep.subr.bf16.mxu0 0
        %1607 = vmatpush1.bf16.msra.mxu0 0
        %1608 = vmatprep.subr.bf16.mxu0 0
        %1609 = vmatpush1.bf16.msra.mxu0 0
        %1610 = vmatprep.subr.bf16.mxu0 0
        %1611 = vmatpush1.bf16.msra.mxu0 0
        %1612 = vmatprep.subr.bf16.mxu0 0
        %1613 = vmatpush1.bf16.msra.mxu0 0
        %1614 = vmatprep.subr.bf16.mxu0 0
        %1615 = vmatpush1.bf16.msra.mxu0 0
        %1616 = vmatprep.subr.bf16.mxu0 0
        %1617 = vmatpush1.bf16.msra.mxu0 0
        %1618 = vmatprep.subr.bf16.mxu0 0
        %1619 = vmatpush1.bf16.msra.mxu0 0
        %1620 = vmatprep.subr.bf16.mxu0 0
        %1621 = vmatpush1.bf16.msra.mxu0 0
        %1622 = vmatprep.subr.bf16.mxu0 0
        %1623 = vmatpush1.bf16.msra.mxu0 0
        %1624 = vmatprep.mubr.bf16.mxu0 0
        %1625 = vmatmul.mubr.bf16.gmra.mrb[0].mxu0 %v1590
        %v1626 = vpop.f32.mrb[0].mxu0
        %v1627 = vadd.f32 %v1562, %v1626
        %v1628 = vpop.f32.mrb[0].mxu0
        %v1629 = vpop.f32.mrb[0].mxu0
        %v1630 = vadd.f32 %v1562, %v1629
        %v1631 = vpop.f32.mrb[0].mxu0
        %1632 = vdwg.mxu0
        %v1633 = vadd.f32 %v1412, %v1627
        %v1634 = vadd.f32 %v1413, %v1630
        %1635 = vst.msk [vmem:[#allocation9] sm:$0xff] %vm717, %v1633
        %1636 = vst.msk [vmem:[#allocation9 + $0x8] sm:$0xff] %vm717, %v1634
        %p1637 = scmp.eq.s32.totalorder %s29, 1
        // Predicated region
        $region101: #{tpu_custom_call.1} parent=79 // pred_check
          %p1638 = pneg %p1637
        $region102: #{tpu_custom_call.1} parent=79 // pred_check_branch
          %1640 = sbr.rel (%p1638) target = $region104
        $region103: #{tpu_custom_call.1} parent=79 // pred_region
          %v1641 = vld [vmem:[%s13] sm:$0x1]
          %v1642 = vld [vmem:[%s14] sm:$0x1]
          %v1643 = vsel %vm717, %v1633, 0.0
          %1644 = vadd.xlane.f32.xlu0 %v1643
          %v1645 = vpop.xlane.xlu0 %1644
          %v1646 = vsel %vm717, %v1634, 0.0
          %1647 = vadd.xlane.f32.xlu0 %v1646
          %v1648 = vpop.xlane.xlu0 %1647
          %v1649 = vmul.f32 %v1633, %v1633
          %v1650 = vmul.f32 %v1634, %v1634
          %v1651 = vsel %vm717, %v1649, 0.0
          %1652 = vadd.xlane.f32.xlu0 %v1651
          %v1653 = vpop.xlane.xlu0 %1652
          %v1654 = vsel %vm717, %v1650, 0.0
          %1655 = vadd.xlane.f32.xlu0 %v1654
          %v1656 = vpop.xlane.xlu0 %1655
          %v1657 = vmul.f32 %v1645, 0.03125
          %v1658 = vmul.f32 %v1648, 0.03125
          %v1659 = vmul.f32 %v1653, 0.03125
          %v1660 = vmul.f32 %v1656, 0.03125
          %v1661 = vmul.f32 %v1657, %v1657
          %v1662 = vmul.f32 %v1658, %v1658
          %v1663 = vsub.f32 %v1659, %v1661
          %v1664 = vsub.f32 %v1660, %v1662
          %v1665 = vsub.f32 %v1633, %v1657
          %v1666 = vsub.f32 %v1634, %v1658
          %v1667 = vadd.f32 %v1663, 1e-05
          %v1668 = vadd.f32 %v1664, 1e-05
          %v1669 = vrsqrt.pop %v1667
          %v1670 = vrsqrt.pop %v1668
          %v1671 = vmul.f32 %v1665, %v1669
          %v1672 = vmul.f32 %v1666, %v1670
          %v1674 = vlaneseq
          %v1675 = vshrl.u32 %v1674, 7
          %v1676 = vsub.s32 0, %v1675
          %v1677 = vrot.slane %v1641, %v1676
          %v1679 = vmul.f32 %v1671, %v1677
          %v1680 = vmul.f32 %v1672, %v1677
          %v1682 = vlaneseq
          %v1683 = vshrl.u32 %v1682, 7
          %v1684 = vsub.s32 0, %v1683
          %v1685 = vrot.slane %v1642, %v1684
          %v1687 = vadd.f32 %v1679, %v1685
          %v1688 = vadd.f32 %v1680, %v1685
          %1689 = vst.msk [vmem:[#allocation9] sm:$0xff] %vm717, %v1687
          %1690 = vst.msk [vmem:[#allocation9 + $0x8] sm:$0xff] %vm717, %v1688
        $region104: #{tpu_custom_call.1} parent=79 // pred_fallthru
          _
        // Predicated region
        $region105: #{tpu_custom_call.1} parent=79 // pred_check
          %p1691 = pneg %p412
        $region106: #{tpu_custom_call.1} parent=79 // pred_check_branch
          %1693 = sbr.rel (%p1691) target = $region108
        $region107: #{tpu_custom_call.1} parent=79 // pred_region
          %s1695 = ssub.s32 256, 256
          %1696 = vsyncadd [#allocation4], %s1695
          %s1697 = sshll.u32 [#allocation9], 4
          %s1698 = int_to_ptr.vmem [resolvable:$true] %s1697
          %1703 = dma.vmem_to_hbm [thread:$0]  %s1698, 256, %s15, [#allocation4], 128, 128, 8
        $region108: #{tpu_custom_call.1} parent=79 // pred_fallthru
          _
        // Predicated region
        $region109: #{tpu_custom_call.1} parent=79 // pred_check
          %p1704 = pneg %p412
        $region110: #{tpu_custom_call.1} parent=79 // pred_check_branch
          %1706 = sbr.rel (%p1704) target = $region112
        $region111: #{tpu_custom_call.1} parent=79 // pred_region
          %1707 = dma.done [#allocation4], 256
        $region112: #{tpu_custom_call.1} parent=79 // pred_fallthru
          _
      $region80: #{tpu_custom_call.1} parent=5 // pred_fallthru
        _
      %p1708 = scmp.le.s32.totalorder 2, %s24
      // Predicated region
      $region113: #{tpu_custom_call.1} parent=5 // pred_check
        %p1709 = pneg %p1708
      $region114: #{tpu_custom_call.1} parent=5 // pred_check_branch
        %1711 = sbr.rel (%p1709) target = $region116
      $region115: #{tpu_custom_call.1} parent=5 // pred_region
        %s1712 = ssub.s32 %s24, 2
      $region116: #{tpu_custom_call.1} parent=5 // pred_fallthru
        _
    $region6: #{tpu_custom_call.1} parent=1 // loop_footer
      %s28 = sadd.s32 1, %s24
    $region7: #{tpu_custom_call.1} parent=1 // loop_footer_branch
      %23 = sbr.rel target = $region3
    $region8: #{tpu_custom_call.1} parent=1 // loop_exit
      _
    %1713 = vsyncpa [#allocation3], 1
    %s1714 = scalar_lea.sflag [#allocation3], 1
    %1715 = vsyncpa %s1714, 1
    %1716 = vsyncpa [#allocation6], 1
    %1717 = vsyncpa [#allocation4], 1
    %s1718 = scalar_lea.sflag [#allocation4], 1
    %1719 = vsyncpa %s1718, 1

</llo_original>
